<compile_context>
chip_gen: v7x
topology: tpu7x:2x2x1
jax: 0.10.0
libtpu: 0.0.40
codegen_flags: <defaults>
</compile_context>

<pallas_src>
import functools

import jax
import jax.numpy as jnp
from jax import lax
from jax.experimental import pallas as pl
from jax.experimental.pallas import tpu as pltpu

EPS = 1e-5


# ------------------------------ in-kernel helpers ------------------------------

def _bn(x, g, b):
    """BatchNorm1d, training-mode batch stats, on the (channels, batch*time) layout.

    Single pass (E[x], E[x^2]) over the flattened batch*time axis; matches
    PyTorch training batch statistics with eps=1e-5.
    """
    inv_n = 1.0 / x.shape[1]
    m = jnp.sum(x, axis=1, keepdims=True) * inv_n
    m2 = jnp.sum(x * x, axis=1, keepdims=True) * inv_n
    v = m2 - m * m
    return g * (x - m) * lax.rsqrt(v + EPS) + b


def _depthwise_dilated(x, wd, dilation, masks):
    """Depthwise dilated 'same' conv along time on the (channels, N*L) layout.

    Taps are fetched with pltpu.roll (XLU) — no padded activation copy.  The
    streamed per-tap masks implement both the conv zero padding and the
    suppression of cross-batch-sample bleed from the circular roll.
    """
    NL = x.shape[1]
    Kc = wd.shape[1]
    pad = dilation * (Kc - 1) // 2        # symmetric only for odd Kc (module default Kc=3)
    acc = None
    for k in range(Kc):
        off = k * dilation - pad          # out[t] += wd[k] * x[t + off]
        w_k = wd[:, k:k + 1]              # (Ch, 1) broadcasts over lanes
        if off == 0:
            term = w_k * x
        else:
            tap = pltpu.roll(x, shift=(-off) % NL, axis=1)   # tap[:, j] = x[:, j + off]
            term = w_k * (tap * masks[k:k + 1, :])
        acc = term if acc is None else acc + term
    return acc


def _tasnet_kernel(dils,
                   patches_ref, wenc_ref, wdec_ref, pko_ref, masks_ref,
                   w1_ref, w2_ref, pkc_ref, pkd_ref,
                   z_ref, y_s, h_s, t_s):
    """One TCN residual block per grid step; encoder / gate+decoder fused on the
    first / last step.  `y` (encoder out) and `h` (residual stream) live in
    VMEM scratch for the whole grid."""
    r_i, b_i = pl.program_id(0), pl.program_id(1)
    is_first = jnp.logical_and(r_i == 0, b_i == 0)
    is_last = jnp.logical_and(r_i == pl.num_programs(0) - 1,
                              b_i == pl.num_programs(1) - 1)
    Kc = masks_ref.shape[0]

    # ---- grid step (0,0): encoder Conv1d (im2col matmul, bf16 MXU) + PReLU ----
    @pl.when(is_first)
    def _():
        y = jnp.dot(wenc_ref[...], patches_ref[...],
                    preferred_element_type=jnp.float32)
        alpha = pko_ref[:, 2:3]                      # shared PReLU slope, (C,1)
        y = jnp.where(y >= 0, y, alpha * y)
        y_s[...] = y
        h_s[...] = y

    # ---- one TCN residual block (weights for this block streamed by BlockSpec) ----
    res = h_s[...]
    t = _bn(res, pkc_ref[:, 0:1], pkc_ref[:, 1:2])                         # BN over C
    t = jnp.dot(w1_ref[...], t.astype(jnp.bfloat16),
                preferred_element_type=jnp.float32)                        # 1x1 C->D
    t = _bn(t, pkd_ref[:, 0:1], pkd_ref[:, 1:2])                           # BN over D
    wd = pkd_ref[:, 4:4 + Kc]                                              # depthwise taps
    masks = masks_ref[...]
    for bi, d in enumerate(dils):                    # dilation is static per branch
        @pl.when(b_i == bi)
        def _(d=d):
            t_s[...] = _depthwise_dilated(t, wd, d, masks)
    t = _bn(t_s[...], pkd_ref[:, 2:3], pkd_ref[:, 3:4])                    # BN over D
    t = jnp.dot(w2_ref[...], t.astype(jnp.bfloat16),
                preferred_element_type=jnp.float32)                        # 1x1 D->C
    h_s[...] = res + t                                                     # residual add

    # ---- last grid step: sigmoid(BN_out(h)) gate + decoder ConvTranspose1d matmul ----
    @pl.when(is_last)
    def _():
        yg = y_s[...] * jax.nn.sigmoid(
            _bn(h_s[...], pko_ref[:, 0:1], pko_ref[:, 1:2]))
        z_ref[...] = jnp.dot(wdec_ref[...], yg.astype(jnp.bfloat16),
                             preferred_element_type=jnp.float32)


# ------------------------------ wrapper ------------------------------

def bitwise_tasnet_forward(x, params, cfg):
    K, S, Kc = cfg["front_kernel_size"], cfg["front_stride"], cfg["kernel_size"]
    R, B = cfg["repeats"], cfg["blocks"]
    N, Cin, T = x.shape
    C = params["w_enc"].shape[0]
    Co = params["w_dec"].shape[1]
    D = params["blocks"][0][0]["w1"].shape[0]
    assert Kc % 2 == 1, "depthwise 'same' padding assumes odd kernel_size"
    L = (T + 2 * K - (K - 1) - 1) // S + 1      # PyTorch Conv1d output length (pad=K)
    NL = N * L
    assert (L - 1) * S >= T, "decoder slice [K:T+K] would run past ConvTranspose1d output"

    # ---- im2col + (channels, batch*time) layout: indexing glue in XLA ----
    xpad = jnp.pad(x, ((0, 0), (0, 0), (K, K)))
    t_idx = jnp.arange(L)[:, None] * S + jnp.arange(K)[None, :]            # (L, K)
    patches = xpad[:, :, t_idx]                                            # (N, Cin, L, K)
    patches = patches.transpose(1, 3, 0, 2).reshape(Cin * K, NL).astype(jnp.bfloat16)
    wenc = params["w_enc"].reshape(C, Cin * K).astype(jnp.bfloat16)
    wdec = params["w_dec"].transpose(1, 2, 0).reshape(Co * K, C).astype(jnp.bfloat16)

    # ---- lane-dense packed parameter slabs ----
    pko = jnp.stack([params["out_g"], params["out_b"],
                     jnp.broadcast_to(params["prelu_alpha"], (C,))], axis=-1)   # (C, 3)

    def stack_rb(fn, dtype=jnp.float32):
        return jnp.stack([jnp.stack([fn(params["blocks"][r][b]) for b in range(B)])
                          for r in range(R)]).astype(dtype)

    w1s = stack_rb(lambda p: p["w1"], jnp.bfloat16)                        # (R, B, D, C)
    w2s = stack_rb(lambda p: p["w2"], jnp.bfloat16)                        # (R, B, C, D)
    pkc = stack_rb(lambda p: jnp.stack([p["g1"], p["b1"]], axis=-1))       # (R, B, C, 2)
    pkd = stack_rb(lambda p: jnp.concatenate(
        [p["g2"][:, None], p["b2"][:, None], p["g3"][:, None], p["b3"][:, None],
         p["wd"]], axis=-1))                                               # (R, B, D, 4+Kc)

    # ---- per-dilation depthwise tap masks (conv zero padding + batch boundaries) ----
    tpos = jnp.arange(NL) % L
    mrows = []
    for b in range(B):
        d = 2 ** b
        pad = d * (Kc - 1) // 2
        mrows.append(jnp.stack(
            [((tpos + (k * d - pad) >= 0) & (tpos + (k * d - pad) < L)).astype(jnp.float32)
             for k in range(Kc)]))
    masks = jnp.stack(mrows)                                               # (B, Kc, NL)

    dils = tuple(2 ** b for b in range(B))
    kernel = functools.partial(_tasnet_kernel, dils)
    z = pl.pallas_call(
        kernel,
        out_shape=jax.ShapeDtypeStruct((Co * K, NL), jnp.float32),
        grid=(R, B),
        in_specs=[
            # resident (constant index map → DMA'd once, stays in VMEM)
            pl.BlockSpec((Cin * K, NL), lambda r, b: (0, 0)),              # patches
            pl.BlockSpec((C, Cin * K), lambda r, b: (0, 0)),               # wenc (bf16)
            pl.BlockSpec((Co * K, C), lambda r, b: (0, 0)),                # wdec (bf16)
            pl.BlockSpec((C, 3), lambda r, b: (0, 0)),                     # out BN + PReLU
            # streamed per grid step (double-buffered by the Pallas pipeline)
            pl.BlockSpec((None, Kc, NL), lambda r, b: (b, 0, 0)),          # tap masks
            pl.BlockSpec((None, None, D, C), lambda r, b: (r, b, 0, 0)),   # w1 (bf16)
            pl.BlockSpec((None, None, C, D), lambda r, b: (r, b, 0, 0)),   # w2 (bf16)
            pl.BlockSpec((None, None, C, 2), lambda r, b: (r, b, 0, 0)),   # g1,b1
            pl.BlockSpec((None, None, D, 4 + Kc), lambda r, b: (r, b, 0, 0)),  # g2,b2,g3,b3,wd
        ],
        out_specs=pl.BlockSpec((Co * K, NL), lambda r, b: (0, 0)),
        scratch_shapes=[pltpu.VMEM((C, NL), jnp.float32),                  # y (encoder out)
                        pltpu.VMEM((C, NL), jnp.float32),                  # h (residual)
                        pltpu.VMEM((D, NL), jnp.float32)],                 # depthwise result
        compiler_params=pltpu.CompilerParams(
            dimension_semantics=("arbitrary", "arbitrary"),
            # Toy shapes fit easily; at production sizes re-derive per generation
            # (cap ~48 MiB on v7x, up to ~100 MiB on v5e/v6e) once NL is tiled.
            vmem_limit_bytes=32 * 1024 * 1024),
    )(patches, wenc, wdec, pko, masks, w1s, w2s, pkc, pkd)

    # ---- ConvTranspose1d overlap-add: reshape-based, ceil(K/S) dense adds ----
    z = z.reshape(Co, K, N, L).transpose(2, 0, 1, 3)                       # (N, Co, K, L)
    nj = -(-K // S)                                                        # ceil(K/S)
    if nj * S > K:
        z = jnp.pad(z, ((0, 0), (0, 0), (0, nj * S - K), (0, 0)))
    z = z.reshape(N, Co, nj, S, L)
    out = jnp.zeros((N, Co, L * S + (nj - 1) * S), jnp.float32)
    for j in range(nj):
        part = z[:, :, j].transpose(0, 1, 3, 2).reshape(N, Co, L * S)      # positions l*S + s
        out = out.at[:, :, j * S:j * S + L * S].add(part)
    return out[:, :, K:T + K]


# ------------------------------ deterministic param init ------------------------------

def init_params(key, Cin, C, D, K, Kc, repeats, blocks):
    n_keys = 2 + repeats * blocks * 3
    keys = iter(jax.random.split(key, n_keys))

    def w(shape, scale=0.1):
        return scale * jax.random.normal(next(keys), shape, jnp.float32)

    params = {
        "w_enc": w((C, Cin, K)),                          # Conv1d(Cin->C, K), bias=False
        "w_dec": w((C, Cin, K)),                          # ConvTranspose1d(C->Cin, K), bias=False
        "prelu_alpha": jnp.full((1,), 0.25, jnp.float32), # nn.PReLU() default init
        "out_g": jnp.ones((C,), jnp.float32),             # out_batchnorm gamma
        "out_b": jnp.zeros((C,), jnp.float32),            # out_batchnorm beta
        "blocks": [],
    }
    for _ in range(repeats):
        row = []
        for _ in range(blocks):
            row.append({
                "w1": w((D, C)),                          # 1x1 conv C -> D
                "wd": w((D, Kc)),                         # depthwise conv (D,1,Kc) squeezed
                "w2": w((C, D)),                          # 1x1 conv D -> C
                "g1": jnp.ones((C,), jnp.float32), "b1": jnp.zeros((C,), jnp.float32),
                "g2": jnp.ones((D,), jnp.float32), "b2": jnp.zeros((D,), jnp.float32),
                "g3": jnp.ones((D,), jnp.float32), "b3": jnp.zeros((D,), jnp.float32),
            })
        params["blocks"].append(row)
    return params


if __name__ == "__main__":
    # Small shapes, chosen so N * L_enc = 2 * 64 = 128 → lane-dense kernel tensors.
    N, Cin, T = 2, 1, 244
    C, D = 64, 64                 # encoder_channels, dconv_size
    K, S, Kc = 8, 4, 3            # front_kernel_size, front_stride, kernel_size
    repeats, blocks = 2, 2

    key = jax.random.PRNGKey(0)
    kx, kp = jax.random.split(key)
    x = jax.random.normal(kx, (N, Cin, T), jnp.float32)
    params = init_params(kp, Cin, C, D, K, Kc, repeats, blocks)

    cfg = dict(front_kernel_size=K, front_stride=S, kernel_size=Kc,
               repeats=repeats, blocks=blocks)
    fwd = jax.jit(functools.partial(bitwise_tasnet_forward, cfg=cfg))
    out = jax.block_until_ready(fwd(x, params))
    assert out.shape == (N, Cin, T), out.shape
    assert bool(jnp.all(jnp.isfinite(out)))
    print("KERNEL_OK")
</pallas_src>

<mosaic_0001>
module attributes {stable_mosaic.version = 11 : i64} {
  func.func @_tasnet_kernel(%arg0: i32, %arg1: i32, %arg2: memref<8x128xbf16, #tpu.memory_space<vmem>>, %arg3: memref<64x8xbf16, #tpu.memory_space<vmem>>, %arg4: memref<8x64xbf16, #tpu.memory_space<vmem>>, %arg5: memref<64x3xf32, #tpu.memory_space<vmem>>, %arg6: memref<1x3x128xf32, #tpu.memory_space<vmem>>, %arg7: memref<1x1x64x64xbf16, #tpu.memory_space<vmem>>, %arg8: memref<1x1x64x64xbf16, #tpu.memory_space<vmem>>, %arg9: memref<1x1x64x2xf32, #tpu.memory_space<vmem>>, %arg10: memref<1x1x64x7xf32, #tpu.memory_space<vmem>>, %arg11: memref<8x128xf32, #tpu.memory_space<vmem>>, %arg12: memref<64x128xf32, #tpu.memory_space<vmem>>, %arg13: memref<64x128xf32, #tpu.memory_space<vmem>>, %arg14: memref<64x128xf32, #tpu.memory_space<vmem>>) attributes {dimension_semantics = [#tpu.dimension_semantics<arbitrary>, #tpu.dimension_semantics<arbitrary>], iteration_bounds = array<i64: 2, 2>, scalar_prefetch = 0 : i64, scratch_operands = 3 : i64, tpu.core_type = #tpu.core_type<tc>, window_params = [{pipeline_mode = #tpu.pipeline_mode<synchronous>, transform_indices = @transform_0, window_bounds = array<i64: 8, 128>}, {pipeline_mode = #tpu.pipeline_mode<synchronous>, transform_indices = @transform_1, window_bounds = array<i64: 64, 8>}, {pipeline_mode = #tpu.pipeline_mode<synchronous>, transform_indices = @transform_2, window_bounds = array<i64: 8, 64>}, {pipeline_mode = #tpu.pipeline_mode<synchronous>, transform_indices = @transform_3, window_bounds = array<i64: 64, 3>}, {transform_indices = @transform_4, window_bounds = array<i64: 1, 3, 128>}, {transform_indices = @transform_5, window_bounds = array<i64: 1, 1, 64, 64>}, {transform_indices = @transform_6, window_bounds = array<i64: 1, 1, 64, 64>}, {transform_indices = @transform_7, window_bounds = array<i64: 1, 1, 64, 2>}, {transform_indices = @transform_8, window_bounds = array<i64: 1, 1, 64, 7>}, {pipeline_mode = #tpu.pipeline_mode<synchronous>, transform_indices = @transform_9, window_bounds = array<i64: 8, 128>}]} {
    %c0_i32 = arith.constant 0 : i32
    %0 = arith.cmpi eq, %arg0, %c0_i32 : i32
    %c0_i32_0 = arith.constant 0 : i32
    %1 = arith.cmpi eq, %arg1, %c0_i32_0 : i32
    %2 = arith.andi %0, %1 : i1
    %c1_i32 = arith.constant 1 : i32
    %3 = arith.cmpi eq, %arg0, %c1_i32 : i32
    %c1_i32_1 = arith.constant 1 : i32
    %4 = arith.cmpi eq, %arg1, %c1_i32_1 : i32
    %5 = arith.andi %3, %4 : i1
    %6 = arith.extui %2 : i1 to i32
    %c0_i32_2 = arith.constant 0 : i32
    %7 = arith.cmpi ne, %6, %c0_i32_2 : i32
    scf.if %7 {
      %c0_64 = arith.constant 0 : index
      %c0_65 = arith.constant 0 : index
      %110 = vector.load %arg3[%c0_64, %c0_65] : memref<64x8xbf16, #tpu.memory_space<vmem>>, vector<64x8xbf16>
      %c0_66 = arith.constant 0 : index
      %c0_67 = arith.constant 0 : index
      %111 = vector.load %arg2[%c0_66, %c0_67] : memref<8x128xbf16, #tpu.memory_space<vmem>>, vector<8x128xbf16>
      %cst_68 = arith.constant dense<0.000000e+00> : vector<64x128xf32>
      %112 = tpu.matmul %110, %111, %cst_68 {dimension_numbers = #tpu.dot_dimension_numbers<[1], [0], [0], [1], [0, 0, 1, 1], [], []>} : vector<64x8xbf16>, vector<8x128xbf16>, vector<64x128xf32> -> vector<64x128xf32>
      %c0_69 = arith.constant 0 : index
      %c2_70 = arith.constant 2 : index
      %113 = vector.load %arg5[%c0_69, %c2_70] : memref<64x3xf32, #tpu.memory_space<vmem>>, vector<64x1xf32>
      %cst_71 = arith.constant 0.000000e+00 : f32
      %114 = vector.broadcast %cst_71 : f32 to vector<64x128xf32>
      %115 = arith.cmpf oge, %112, %114 : vector<64x128xf32>
      %116 = vector.broadcast %113 : vector<64x1xf32> to vector<64x128xf32>
      %117 = arith.mulf %116, %112 : vector<64x128xf32>
      %118 = arith.select %115, %112, %117 : vector<64x128xi1>, vector<64x128xf32>
      %c0_72 = arith.constant 0 : index
      %c0_73 = arith.constant 0 : index
      %119 = vector.load %arg12[%c0_72, %c0_73] : memref<64x128xf32, #tpu.memory_space<vmem>>, vector<64x128xf32>
      tpu.vector_store %arg12[%c0_72, %c0_73], %118 {strides = array<i32>} : memref<64x128xf32, #tpu.memory_space<vmem>>, vector<64x128xf32>,
      %c0_74 = arith.constant 0 : index
      %c0_75 = arith.constant 0 : index
      %120 = vector.load %arg13[%c0_74, %c0_75] : memref<64x128xf32, #tpu.memory_space<vmem>>, vector<64x128xf32>
      tpu.vector_store %arg13[%c0_74, %c0_75], %118 {strides = array<i32>} : memref<64x128xf32, #tpu.memory_space<vmem>>, vector<64x128xf32>,
    } else {
    }
    %c0 = arith.constant 0 : index
    %c0_3 = arith.constant 0 : index
    %8 = vector.load %arg13[%c0, %c0_3] : memref<64x128xf32, #tpu.memory_space<vmem>>, vector<64x128xf32>
    %c0_4 = arith.constant 0 : index
    %c0_5 = arith.constant 0 : index
    %c0_6 = arith.constant 0 : index
    %c0_7 = arith.constant 0 : index
    %9 = vector.load %arg9[%c0_4, %c0_5, %c0_6, %c0_7] : memref<1x1x64x2xf32, #tpu.memory_space<vmem>>, vector<1x1x64x1xf32>
    %10 = vector.shape_cast %9 : vector<1x1x64x1xf32> to vector<64x1xf32>
    %c0_8 = arith.constant 0 : index
    %c0_9 = arith.constant 0 : index
    %c0_10 = arith.constant 0 : index
    %c1 = arith.constant 1 : index
    %11 = vector.load %arg9[%c0_8, %c0_9, %c0_10, %c1] : memref<1x1x64x2xf32, #tpu.memory_space<vmem>>, vector<1x1x64x1xf32>
    %12 = vector.shape_cast %11 : vector<1x1x64x1xf32> to vector<64x1xf32>
    %cst = arith.constant dense<0.000000e+00> : vector<64xf32>
    %13 = vector.multi_reduction <add>, %8, %cst [1] : vector<64x128xf32> to vector<64xf32>
    %14 = vector.shape_cast %13 : vector<64xf32> to vector<64x1xf32>
    %cst_11 = arith.constant 7.812500e-03 : f32
    %15 = vector.broadcast %cst_11 : f32 to vector<64x1xf32>
    %16 = arith.mulf %14, %15 : vector<64x1xf32>
    %17 = arith.mulf %8, %8 : vector<64x128xf32>
    %cst_12 = arith.constant dense<0.000000e+00> : vector<64xf32>
    %18 = vector.multi_reduction <add>, %17, %cst_12 [1] : vector<64x128xf32> to vector<64xf32>
    %19 = vector.shape_cast %18 : vector<64xf32> to vector<64x1xf32>
    %cst_13 = arith.constant 7.812500e-03 : f32
    %20 = vector.broadcast %cst_13 : f32 to vector<64x1xf32>
    %21 = arith.mulf %19, %20 : vector<64x1xf32>
    %22 = arith.mulf %16, %16 : vector<64x1xf32>
    %23 = arith.subf %21, %22 : vector<64x1xf32>
    %24 = vector.broadcast %16 : vector<64x1xf32> to vector<64x128xf32>
    %25 = arith.subf %8, %24 : vector<64x128xf32>
    %26 = vector.broadcast %10 : vector<64x1xf32> to vector<64x128xf32>
    %27 = arith.mulf %26, %25 : vector<64x128xf32>
    %cst_14 = arith.constant 9.99999974E-6 : f32
    %28 = vector.broadcast %cst_14 : f32 to vector<64x1xf32>
    %29 = arith.addf %23, %28 : vector<64x1xf32>
    %30 = math.rsqrt %29 : vector<64x1xf32>
    %31 = vector.broadcast %30 : vector<64x1xf32> to vector<64x128xf32>
    %32 = arith.mulf %27, %31 : vector<64x128xf32>
    %33 = vector.broadcast %12 : vector<64x1xf32> to vector<64x128xf32>
    %34 = arith.addf %32, %33 : vector<64x128xf32>
    %c0_15 = arith.constant 0 : index
    %c0_16 = arith.constant 0 : index
    %c0_17 = arith.constant 0 : index
    %c0_18 = arith.constant 0 : index
    %35 = vector.load %arg7[%c0_15, %c0_16, %c0_17, %c0_18] : memref<1x1x64x64xbf16, #tpu.memory_space<vmem>>, vector<1x1x64x64xbf16>
    %36 = vector.shape_cast %35 : vector<1x1x64x64xbf16> to vector<64x64xbf16>
    %37 = arith.truncf %34 : vector<64x128xf32> to vector<64x128xbf16>
    %cst_19 = arith.constant dense<0.000000e+00> : vector<64x128xf32>
    %38 = tpu.matmul %36, %37, %cst_19 {dimension_numbers = #tpu.dot_dimension_numbers<[1], [0], [0], [1], [0, 0, 1, 1], [], []>} : vector<64x64xbf16>, vector<64x128xbf16>, vector<64x128xf32> -> vector<64x128xf32>
    %c0_20 = arith.constant 0 : index
    %c0_21 = arith.constant 0 : index
    %c0_22 = arith.constant 0 : index
    %c0_23 = arith.constant 0 : index
    %39 = vector.load %arg10[%c0_20, %c0_21, %c0_22, %c0_23] : memref<1x1x64x7xf32, #tpu.memory_space<vmem>>, vector<1x1x64x1xf32>
    %40 = vector.shape_cast %39 : vector<1x1x64x1xf32> to vector<64x1xf32>
    %c0_24 = arith.constant 0 : index
    %c0_25 = arith.constant 0 : index
    %c0_26 = arith.constant 0 : index
    %c1_27 = arith.constant 1 : index
    %41 = vector.load %arg10[%c0_24, %c0_25, %c0_26, %c1_27] : memref<1x1x64x7xf32, #tpu.memory_space<vmem>>, vector<1x1x64x1xf32>
    %42 = vector.shape_cast %41 : vector<1x1x64x1xf32> to vector<64x1xf32>
    %cst_28 = arith.constant dense<0.000000e+00> : vector<64xf32>
    %43 = vector.multi_reduction <add>, %38, %cst_28 [1] : vector<64x128xf32> to vector<64xf32>
    %44 = vector.shape_cast %43 : vector<64xf32> to vector<64x1xf32>
    %cst_29 = arith.constant 7.812500e-03 : f32
    %45 = vector.broadcast %cst_29 : f32 to vector<64x1xf32>
    %46 = arith.mulf %44, %45 : vector<64x1xf32>
    %47 = arith.mulf %38, %38 : vector<64x128xf32>
    %cst_30 = arith.constant dense<0.000000e+00> : vector<64xf32>
    %48 = vector.multi_reduction <add>, %47, %cst_30 [1] : vector<64x128xf32> to vector<64xf32>
    %49 = vector.shape_cast %48 : vector<64xf32> to vector<64x1xf32>
    %cst_31 = arith.constant 7.812500e-03 : f32
    %50 = vector.broadcast %cst_31 : f32 to vector<64x1xf32>
    %51 = arith.mulf %49, %50 : vector<64x1xf32>
    %52 = arith.mulf %46, %46 : vector<64x1xf32>
    %53 = arith.subf %51, %52 : vector<64x1xf32>
    %54 = vector.broadcast %46 : vector<64x1xf32> to vector<64x128xf32>
    %55 = arith.subf %38, %54 : vector<64x128xf32>
    %56 = vector.broadcast %40 : vector<64x1xf32> to vector<64x128xf32>
    %57 = arith.mulf %56, %55 : vector<64x128xf32>
    %cst_32 = arith.constant 9.99999974E-6 : f32
    %58 = vector.broadcast %cst_32 : f32 to vector<64x1xf32>
    %59 = arith.addf %53, %58 : vector<64x1xf32>
    %60 = math.rsqrt %59 : vector<64x1xf32>
    %61 = vector.broadcast %60 : vector<64x1xf32> to vector<64x128xf32>
    %62 = arith.mulf %57, %61 : vector<64x128xf32>
    %63 = vector.broadcast %42 : vector<64x1xf32> to vector<64x128xf32>
    %64 = arith.addf %62, %63 : vector<64x128xf32>
    %c0_33 = arith.constant 0 : index
    %c0_34 = arith.constant 0 : index
    %c0_35 = arith.constant 0 : index
    %c4 = arith.constant 4 : index
    %65 = vector.load %arg10[%c0_33, %c0_34, %c0_35, %c4] : memref<1x1x64x7xf32, #tpu.memory_space<vmem>>, vector<1x1x64x3xf32>
    %66 = vector.shape_cast %65 : vector<1x1x64x3xf32> to vector<64x3xf32>
    %c0_36 = arith.constant 0 : index
    %c0_37 = arith.constant 0 : index
    %c0_38 = arith.constant 0 : index
    %67 = vector.load %arg6[%c0_36, %c0_37, %c0_38] : memref<1x3x128xf32, #tpu.memory_space<vmem>>, vector<1x3x128xf32>
    %68 = vector.shape_cast %67 : vector<1x3x128xf32> to vector<3x128xf32>
    %c0_i32_39 = arith.constant 0 : i32
    %69 = arith.cmpi eq, %arg1, %c0_i32_39 : i32
    %70 = arith.extui %69 : i1 to i32
    %c0_i32_40 = arith.constant 0 : i32
    %71 = arith.cmpi ne, %70, %c0_i32_40 : i32
    scf.if %71 {
      %110 = vector.extract_strided_slice %66 {offsets = [0, 0], sizes = [64, 1], strides = [1, 1]} : vector<64x3xf32> to vector<64x1xf32>
      %c1_i32_64 = arith.constant 1 : i32
      %111 = tpu.dynamic_rotate %64 by %c1_i32_64 dim 1 : vector<64x128xf32>, i32 -> vector<64x128xf32>
      %112 = vector.extract_strided_slice %68 {offsets = [0, 0], sizes = [1, 128], strides = [1, 1]} : vector<3x128xf32> to vector<1x128xf32>
      %113 = vector.broadcast %112 : vector<1x128xf32> to vector<64x128xf32>
      %114 = arith.mulf %111, %113 : vector<64x128xf32>
      %115 = vector.broadcast %110 : vector<64x1xf32> to vector<64x128xf32>
      %116 = arith.mulf %115, %114 : vector<64x128xf32>
      %117 = vector.extract_strided_slice %66 {offsets = [0, 1], sizes = [64, 1], strides = [1, 1]} : vector<64x3xf32> to vector<64x1xf32>
      %118 = vector.broadcast %117 : vector<64x1xf32> to vector<64x128xf32>
      %119 = arith.mulf %118, %64 : vector<64x128xf32>
      %120 = arith.addf %116, %119 : vector<64x128xf32>
      %121 = vector.extract_strided_slice %66 {offsets = [0, 2], sizes = [64, 1], strides = [1, 1]} : vector<64x3xf32> to vector<64x1xf32>
      %c127_i32 = arith.constant 127 : i32
      %122 = tpu.dynamic_rotate %64 by %c127_i32 dim 1 : vector<64x128xf32>, i32 -> vector<64x128xf32>
      %123 = vector.extract_strided_slice %68 {offsets = [2, 0], sizes = [1, 128], strides = [1, 1]} : vector<3x128xf32> to vector<1x128xf32>
      %124 = vector.broadcast %123 : vector<1x128xf32> to vector<64x128xf32>
      %125 = arith.mulf %122, %124 : vector<64x128xf32>
      %126 = vector.broadcast %121 : vector<64x1xf32> to vector<64x128xf32>
      %127 = arith.mulf %126, %125 : vector<64x128xf32>
      %128 = arith.addf %120, %127 : vector<64x128xf32>
      %c0_65 = arith.constant 0 : index
      %c0_66 = arith.constant 0 : index
      %129 = vector.load %arg14[%c0_65, %c0_66] : memref<64x128xf32, #tpu.memory_space<vmem>>, vector<64x128xf32>
      tpu.vector_store %arg14[%c0_65, %c0_66], %128 {strides = array<i32>} : memref<64x128xf32, #tpu.memory_space<vmem>>, vector<64x128xf32>,
    } else {
    }
    %c1_i32_41 = arith.constant 1 : i32
    %72 = arith.cmpi eq, %arg1, %c1_i32_41 : i32
    %73 = arith.extui %72 : i1 to i32
    %c0_i32_42 = arith.constant 0 : i32
    %74 = arith.cmpi ne, %73, %c0_i32_42 : i32
    scf.if %74 {
      %110 = vector.extract_strided_slice %66 {offsets = [0, 0], sizes = [64, 1], strides = [1, 1]} : vector<64x3xf32> to vector<64x1xf32>
      %c2_i32 = arith.constant 2 : i32
      %111 = tpu.dynamic_rotate %64 by %c2_i32 dim 1 : vector<64x128xf32>, i32 -> vector<64x128xf32>
      %112 = vector.extract_strided_slice %68 {offsets = [0, 0], sizes = [1, 128], strides = [1, 1]} : vector<3x128xf32> to vector<1x128xf32>
      %113 = vector.broadcast %112 : vector<1x128xf32> to vector<64x128xf32>
      %114 = arith.mulf %111, %113 : vector<64x128xf32>
      %115 = vector.broadcast %110 : vector<64x1xf32> to vector<64x128xf32>
      %116 = arith.mulf %115, %114 : vector<64x128xf32>
      %117 = vector.extract_strided_slice %66 {offsets = [0, 1], sizes = [64, 1], strides = [1, 1]} : vector<64x3xf32> to vector<64x1xf32>
      %118 = vector.broadcast %117 : vector<64x1xf32> to vector<64x128xf32>
      %119 = arith.mulf %118, %64 : vector<64x128xf32>
      %120 = arith.addf %116, %119 : vector<64x128xf32>
      %121 = vector.extract_strided_slice %66 {offsets = [0, 2], sizes = [64, 1], strides = [1, 1]} : vector<64x3xf32> to vector<64x1xf32>
      %c126_i32 = arith.constant 126 : i32
      %122 = tpu.dynamic_rotate %64 by %c126_i32 dim 1 : vector<64x128xf32>, i32 -> vector<64x128xf32>
      %123 = vector.extract_strided_slice %68 {offsets = [2, 0], sizes = [1, 128], strides = [1, 1]} : vector<3x128xf32> to vector<1x128xf32>
      %124 = vector.broadcast %123 : vector<1x128xf32> to vector<64x128xf32>
      %125 = arith.mulf %122, %124 : vector<64x128xf32>
      %126 = vector.broadcast %121 : vector<64x1xf32> to vector<64x128xf32>
      %127 = arith.mulf %126, %125 : vector<64x128xf32>
      %128 = arith.addf %120, %127 : vector<64x128xf32>
      %c0_64 = arith.constant 0 : index
      %c0_65 = arith.constant 0 : index
      %129 = vector.load %arg14[%c0_64, %c0_65] : memref<64x128xf32, #tpu.memory_space<vmem>>, vector<64x128xf32>
      tpu.vector_store %arg14[%c0_64, %c0_65], %128 {strides = array<i32>} : memref<64x128xf32, #tpu.memory_space<vmem>>, vector<64x128xf32>,
    } else {
    }
    %c0_43 = arith.constant 0 : index
    %c0_44 = arith.constant 0 : index
    %75 = vector.load %arg14[%c0_43, %c0_44] : memref<64x128xf32, #tpu.memory_space<vmem>>, vector<64x128xf32>
    %c0_45 = arith.constant 0 : index
    %c0_46 = arith.constant 0 : index
    %c0_47 = arith.constant 0 : index
    %c2 = arith.constant 2 : index
    %76 = vector.load %arg10[%c0_45, %c0_46, %c0_47, %c2] : memref<1x1x64x7xf32, #tpu.memory_space<vmem>>, vector<1x1x64x1xf32>
    %77 = vector.shape_cast %76 : vector<1x1x64x1xf32> to vector<64x1xf32>
    %c0_48 = arith.constant 0 : index
    %c0_49 = arith.constant 0 : index
    %c0_50 = arith.constant 0 : index
    %c3 = arith.constant 3 : index
    %78 = vector.load %arg10[%c0_48, %c0_49, %c0_50, %c3] : memref<1x1x64x7xf32, #tpu.memory_space<vmem>>, vector<1x1x64x1xf32>
    %79 = vector.shape_cast %78 : vector<1x1x64x1xf32> to vector<64x1xf32>
    %cst_51 = arith.constant dense<0.000000e+00> : vector<64xf32>
    %80 = vector.multi_reduction <add>, %75, %cst_51 [1] : vector<64x128xf32> to vector<64xf32>
    %81 = vector.shape_cast %80 : vector<64xf32> to vector<64x1xf32>
    %cst_52 = arith.constant 7.812500e-03 : f32
    %82 = vector.broadcast %cst_52 : f32 to vector<64x1xf32>
    %83 = arith.mulf %81, %82 : vector<64x1xf32>
    %84 = arith.mulf %75, %75 : vector<64x128xf32>
    %cst_53 = arith.constant dense<0.000000e+00> : vector<64xf32>
    %85 = vector.multi_reduction <add>, %84, %cst_53 [1] : vector<64x128xf32> to vector<64xf32>
    %86 = vector.shape_cast %85 : vector<64xf32> to vector<64x1xf32>
    %cst_54 = arith.constant 7.812500e-03 : f32
    %87 = vector.broadcast %cst_54 : f32 to vector<64x1xf32>
    %88 = arith.mulf %86, %87 : vector<64x1xf32>
    %89 = arith.mulf %83, %83 : vector<64x1xf32>
    %90 = arith.subf %88, %89 : vector<64x1xf32>
    %91 = vector.broadcast %83 : vector<64x1xf32> to vector<64x128xf32>
    %92 = arith.subf %75, %91 : vector<64x128xf32>
    %93 = vector.broadcast %77 : vector<64x1xf32> to vector<64x128xf32>
    %94 = arith.mulf %93, %92 : vector<64x128xf32>
    %cst_55 = arith.constant 9.99999974E-6 : f32
    %95 = vector.broadcast %cst_55 : f32 to vector<64x1xf32>
    %96 = arith.addf %90, %95 : vector<64x1xf32>
    %97 = math.rsqrt %96 : vector<64x1xf32>
    %98 = vector.broadcast %97 : vector<64x1xf32> to vector<64x128xf32>
    %99 = arith.mulf %94, %98 : vector<64x128xf32>
    %100 = vector.broadcast %79 : vector<64x1xf32> to vector<64x128xf32>
    %101 = arith.addf %99, %100 : vector<64x128xf32>
    %c0_56 = arith.constant 0 : index
    %c0_57 = arith.constant 0 : index
    %c0_58 = arith.constant 0 : index
    %c0_59 = arith.constant 0 : index
    %102 = vector.load %arg8[%c0_56, %c0_57, %c0_58, %c0_59] : memref<1x1x64x64xbf16, #tpu.memory_space<vmem>>, vector<1x1x64x64xbf16>
    %103 = vector.shape_cast %102 : vector<1x1x64x64xbf16> to vector<64x64xbf16>
    %104 = arith.truncf %101 : vector<64x128xf32> to vector<64x128xbf16>
    %cst_60 = arith.constant dense<0.000000e+00> : vector<64x128xf32>
    %105 = tpu.matmul %103, %104, %cst_60 {dimension_numbers = #tpu.dot_dimension_numbers<[1], [0], [0], [1], [0, 0, 1, 1], [], []>} : vector<64x64xbf16>, vector<64x128xbf16>, vector<64x128xf32> -> vector<64x128xf32>
    %106 = arith.addf %8, %105 : vector<64x128xf32>
    %c0_61 = arith.constant 0 : index
    %c0_62 = arith.constant 0 : index
    %107 = vector.load %arg13[%c0_61, %c0_62] : memref<64x128xf32, #tpu.memory_space<vmem>>, vector<64x128xf32>
    tpu.vector_store %arg13[%c0_61, %c0_62], %106 {strides = array<i32>} : memref<64x128xf32, #tpu.memory_space<vmem>>, vector<64x128xf32>,
    %108 = arith.extui %5 : i1 to i32
    %c0_i32_63 = arith.constant 0 : i32
    %109 = arith.cmpi ne, %108, %c0_i32_63 : i32
    scf.if %109 {
      %c0_64 = arith.constant 0 : index
      %c0_65 = arith.constant 0 : index
      %110 = vector.load %arg12[%c0_64, %c0_65] : memref<64x128xf32, #tpu.memory_space<vmem>>, vector<64x128xf32>
      %c0_66 = arith.constant 0 : index
      %c0_67 = arith.constant 0 : index
      %111 = vector.load %arg13[%c0_66, %c0_67] : memref<64x128xf32, #tpu.memory_space<vmem>>, vector<64x128xf32>
      %c0_68 = arith.constant 0 : index
      %c0_69 = arith.constant 0 : index
      %112 = vector.load %arg5[%c0_68, %c0_69] : memref<64x3xf32, #tpu.memory_space<vmem>>, vector<64x1xf32>
      %c0_70 = arith.constant 0 : index
      %c1_71 = arith.constant 1 : index
      %113 = vector.load %arg5[%c0_70, %c1_71] : memref<64x3xf32, #tpu.memory_space<vmem>>, vector<64x1xf32>
      %cst_72 = arith.constant dense<0.000000e+00> : vector<64xf32>
      %114 = vector.multi_reduction <add>, %111, %cst_72 [1] : vector<64x128xf32> to vector<64xf32>
      %115 = vector.shape_cast %114 : vector<64xf32> to vector<64x1xf32>
      %cst_73 = arith.constant 7.812500e-03 : f32
      %116 = vector.broadcast %cst_73 : f32 to vector<64x1xf32>
      %117 = arith.mulf %115, %116 : vector<64x1xf32>
      %118 = arith.mulf %111, %111 : vector<64x128xf32>
      %cst_74 = arith.constant dense<0.000000e+00> : vector<64xf32>
      %119 = vector.multi_reduction <add>, %118, %cst_74 [1] : vector<64x128xf32> to vector<64xf32>
      %120 = vector.shape_cast %119 : vector<64xf32> to vector<64x1xf32>
      %cst_75 = arith.constant 7.812500e-03 : f32
      %121 = vector.broadcast %cst_75 : f32 to vector<64x1xf32>
      %122 = arith.mulf %120, %121 : vector<64x1xf32>
      %123 = arith.mulf %117, %117 : vector<64x1xf32>
      %124 = arith.subf %122, %123 : vector<64x1xf32>
      %125 = vector.broadcast %117 : vector<64x1xf32> to vector<64x128xf32>
      %126 = arith.subf %111, %125 : vector<64x128xf32>
      %127 = vector.broadcast %112 : vector<64x1xf32> to vector<64x128xf32>
      %128 = arith.mulf %127, %126 : vector<64x128xf32>
      %cst_76 = arith.constant 9.99999974E-6 : f32
      %129 = vector.broadcast %cst_76 : f32 to vector<64x1xf32>
      %130 = arith.addf %124, %129 : vector<64x1xf32>
      %131 = math.rsqrt %130 : vector<64x1xf32>
      %132 = vector.broadcast %131 : vector<64x1xf32> to vector<64x128xf32>
      %133 = arith.mulf %128, %132 : vector<64x128xf32>
      %134 = vector.broadcast %113 : vector<64x1xf32> to vector<64x128xf32>
      %135 = arith.addf %133, %134 : vector<64x128xf32>
      %136 = arith.negf %135 : vector<64x128xf32>
      %137 = math.exp %136 : vector<64x128xf32>
      %cst_77 = arith.constant 1.000000e+00 : f32
      %138 = vector.broadcast %cst_77 : f32 to vector<64x128xf32>
      %139 = arith.addf %138, %137 : vector<64x128xf32>
      %140 = arith.divf %138, %139 : vector<64x128xf32>
      %141 = arith.mulf %110, %140 : vector<64x128xf32>
      %c0_78 = arith.constant 0 : index
      %c0_79 = arith.constant 0 : index
      %142 = vector.load %arg4[%c0_78, %c0_79] : memref<8x64xbf16, #tpu.memory_space<vmem>>, vector<8x64xbf16>
      %143 = arith.truncf %141 : vector<64x128xf32> to vector<64x128xbf16>
      %cst_80 = arith.constant dense<0.000000e+00> : vector<8x128xf32>
      %144 = tpu.matmul %142, %143, %cst_80 {dimension_numbers = #tpu.dot_dimension_numbers<[1], [0], [0], [1], [0, 0, 1, 1], [], []>} : vector<8x64xbf16>, vector<64x128xbf16>, vector<8x128xf32> -> vector<8x128xf32>
      %c0_81 = arith.constant 0 : index
      %c0_82 = arith.constant 0 : index
      %145 = vector.load %arg11[%c0_81, %c0_82] : memref<8x128xf32, #tpu.memory_space<vmem>>, vector<8x128xf32>
      tpu.vector_store %arg11[%c0_81, %c0_82], %144 {strides = array<i32>} : memref<8x128xf32, #tpu.memory_space<vmem>>, vector<8x128xf32>,
    } else {
    }
    return
  }
  func.func @transform_0(%arg0: i32, %arg1: i32) -> (i32, i32) {
    %c0_i32 = arith.constant 0 : i32
    %c0_i32_0 = arith.constant 0 : i32
    %c0_i32_1 = arith.constant 0 : i32
    return %c0_i32, %c0_i32_0 : i32, i32
  }
  func.func @transform_1(%arg0: i32, %arg1: i32) -> (i32, i32) {
    %c0_i32 = arith.constant 0 : i32
    %c0_i32_0 = arith.constant 0 : i32
    %c0_i32_1 = arith.constant 0 : i32
    return %c0_i32, %c0_i32_0 : i32, i32
  }
  func.func @transform_2(%arg0: i32, %arg1: i32) -> (i32, i32) {
    %c0_i32 = arith.constant 0 : i32
    %c0_i32_0 = arith.constant 0 : i32
    %c0_i32_1 = arith.constant 0 : i32
    return %c0_i32, %c0_i32_0 : i32, i32
  }
  func.func @transform_3(%arg0: i32, %arg1: i32) -> (i32, i32) {
    %c0_i32 = arith.constant 0 : i32
    %c0_i32_0 = arith.constant 0 : i32
    %c0_i32_1 = arith.constant 0 : i32
    return %c0_i32, %c0_i32_0 : i32, i32
  }
  func.func @transform_4(%arg0: i32, %arg1: i32) -> (i32, i32, i32) {
    %c0_i32 = arith.constant 0 : i32
    %c0_i32_0 = arith.constant 0 : i32
    %c0_i32_1 = arith.constant 0 : i32
    return %arg1, %c0_i32, %c0_i32_0 : i32, i32, i32
  }
  func.func @transform_5(%arg0: i32, %arg1: i32) -> (i32, i32, i32, i32) {
    %c0_i32 = arith.constant 0 : i32
    %c0_i32_0 = arith.constant 0 : i32
    %c0_i32_1 = arith.constant 0 : i32
    return %arg0, %arg1, %c0_i32, %c0_i32_0 : i32, i32, i32, i32
  }
  func.func @transform_6(%arg0: i32, %arg1: i32) -> (i32, i32, i32, i32) {
    %c0_i32 = arith.constant 0 : i32
    %c0_i32_0 = arith.constant 0 : i32
    %c0_i32_1 = arith.constant 0 : i32
    return %arg0, %arg1, %c0_i32, %c0_i32_0 : i32, i32, i32, i32
  }
  func.func @transform_7(%arg0: i32, %arg1: i32) -> (i32, i32, i32, i32) {
    %c0_i32 = arith.constant 0 : i32
    %c0_i32_0 = arith.constant 0 : i32
    %c0_i32_1 = arith.constant 0 : i32
    return %arg0, %arg1, %c0_i32, %c0_i32_0 : i32, i32, i32, i32
  }
  func.func @transform_8(%arg0: i32, %arg1: i32) -> (i32, i32, i32, i32) {
    %c0_i32 = arith.constant 0 : i32
    %c0_i32_0 = arith.constant 0 : i32
    %c0_i32_1 = arith.constant 0 : i32
    return %arg0, %arg1, %c0_i32, %c0_i32_0 : i32, i32, i32, i32
  }
  func.func @transform_9(%arg0: i32, %arg1: i32) -> (i32, i32) {
    %c0_i32 = arith.constant 0 : i32
    %c0_i32_0 = arith.constant 0 : i32
    %c0_i32_1 = arith.constant 0 : i32
    return %c0_i32, %c0_i32_0 : i32, i32
  }
}

</mosaic_0001>

<llo_original>
// kernel: bitwise_tasnet_forward.1
$region0: #{bitwise_tasnet_forward.1}
  #allocation0 [shape = 'u32[]', space=smem, size = 0x4, offset = 0x4, fixed_abs, tag = 'smem constant byte address 0x4 - core index']
  #allocation1 [shape = 'u32[144,128]{1,0:T(1,128)}', space=vmem, size = 0x12000, scoped, tag = 'internal scratch']
  #allocation2 [shape = 'f32[64,128]{1,0:T(8,128)}', space=vmem, size = 0x8000, scoped, tag = 'scratch operand']
  #allocation3 [shape = 'f32[64,128]{1,0:T(8,128)}', space=vmem, size = 0x8000, scoped, tag = 'scratch operand']
  #allocation4 [shape = 'f32[64,128]{1,0:T(8,128)}', space=vmem, size = 0x8000, scoped, tag = 'scratch operand']
  %s0 = inlined_call_operand.vmem [shape: bf16[8,128], index: 0, kind: input, shape index: {}]
  %s1 = inlined_call_operand.vmem [shape: bf16[64,8], index: 1, kind: input, shape index: {}]
  %s2 = inlined_call_operand.vmem [shape: bf16[8,64], index: 2, kind: input, shape index: {}]
  %s3 = inlined_call_operand.vmem [shape: f32[64,3], index: 3, kind: input, shape index: {}]
  %s4 = inlined_call_operand.vmem [shape: f32[2,3,128], index: 4, kind: input, shape index: {}]
  %s5 = inlined_call_operand.vmem [shape: bf16[2,2,64,64], index: 5, kind: input, shape index: {}]
  %s6 = inlined_call_operand.vmem [shape: bf16[2,2,64,64], index: 6, kind: input, shape index: {}]
  %s7 = inlined_call_operand.vmem [shape: f32[2,2,64,2], index: 7, kind: input, shape index: {}]
  %s8 = inlined_call_operand.vmem [shape: f32[2,2,64,7], index: 8, kind: input, shape index: {}]
  %s9 = inlined_call_operand.vmem [shape: f32[8,128], index: 9, kind: output, shape index: {}]
  %s10 = sld [smem:[#allocation0]]
  $region85: #{bitwise_tasnet_forward.1} parent=0
    _
  %s12 = ssub.s32 1, %s10
  %s13 = scalar_select 0, %s12, %s10
  loop: start=0, step=1, limit=6
  $region2: #{bitwise_tasnet_forward.1} parent=0 // loop_pre_header
    _
  $region3: #{bitwise_tasnet_forward.1} parent=0 // loop_header
    %s15 = sphi 0, %s19
    %p16 = scmp.ge.s32.totalorder %s15, 6
    %s22 = sphi 0, %s34
    %s23 = sphi 0, %s30
    %s24 = sphi 0, %s22
    %s25 = sphi 0, %s23
    %s26 = sphi 0, %s24
    %s27 = sphi 0, %s25
    %s35 = sphi 0, %s35
    %s37 = sphi 0, %s35
    %s38 = sphi 0, %s37
    %s52 = sphi 0, %s38
    %s56 = sphi 0, %s56
    %s58 = sphi 0, %s56
    %s59 = sphi 0, %s58
    %s73 = sphi 0, %s59
    %s77 = sphi 0, %s77
    %s79 = sphi 0, %s77
    %s80 = sphi 0, %s79
    %s94 = sphi 0, %s80
    %s98 = sphi 0, %s98
    %s100 = sphi 0, %s98
    %s101 = sphi 0, %s100
    %s115 = sphi 0, %s101
    %s121 = sphi 0, %s123
    %s124 = sphi 0, %s121
    %s125 = sphi 0, %s124
    %s141 = sphi 0, %s125
    %s149 = sphi 0, %s151
    %s152 = sphi 0, %s149
    %s153 = sphi 0, %s152
    %s169 = sphi 0, %s153
    %s177 = sphi 0, %s179
    %s180 = sphi 0, %s177
    %s181 = sphi 0, %s180
    %s197 = sphi 0, %s181
    %s205 = sphi 0, %s207
    %s208 = sphi 0, %s205
    %s209 = sphi 0, %s208
    %s225 = sphi 0, %s209
    %s233 = sphi 0, %s235
    %s236 = sphi 0, %s233
    %s237 = sphi 0, %s236
    %s253 = sphi 0, %s237
    %s257 = sphi 0, %s257
    %s259 = sphi 0, %s257
    %s260 = sphi 0, %s259
    %s274 = sphi 0, %s260
  $region4: #{bitwise_tasnet_forward.1} parent=0 // loop_header_branch
    %18 = sbr.rel (%p16) target = $region8
  $region5: #{bitwise_tasnet_forward.1} parent=0 // loop_body
    %s20 = ssub.s32 %s15, 1
    %s21 = ssub.s32 %s15, 2
    %s28 = sadd.s32 1, %s23
    %p29 = scmp.ge.s32.totalorder %s28, 2
    %s30 = scalar_select %p29, 0, %s28
    %s31 = sadd.s32 1, %s22
    %s32 = scalar_select %p29, %s31, %s22
    %p33 = scmp.ge.s32.totalorder %s32, 2
    %s34 = scalar_select %p33, 0, %s32
    %s36 = sadd.s32 %s35, 1
    %p39 = scmp.eq.s32.totalorder %s15, 3
    %p40 = scmp.ne.s32.totalorder %s35, %s37
    %p41 = scmp.eq.s32.totalorder %s15, 0
    %p42 = por %p40, %p41
    %p43 = scmp.ne.s32.totalorder %s35, %s37
    %p44 = scmp.eq.s32.totalorder %s20, 3
    %p45 = por %p43, %p44
    %p46 = scmp.ne.s32.totalorder %s37, %s38
    %p47 = scmp.eq.s32.totalorder %s20, 0
    %p48 = por %p46, %p47
    %p49 = scmp.ne.s32.totalorder %s37, %s38
    %p50 = scmp.eq.s32.totalorder %s21, 3
    %p51 = por %p49, %p50
    %p53 = scmp.ne.s32.totalorder %s38, %s52
    %p54 = scmp.eq.s32.totalorder %s21, 0
    %p55 = por %p53, %p54
    %s57 = sadd.s32 %s56, 1
    %p60 = scmp.eq.s32.totalorder %s15, 3
    %p61 = scmp.ne.s32.totalorder %s56, %s58
    %p62 = scmp.eq.s32.totalorder %s15, 0
    %p63 = por %p61, %p62
    %p64 = scmp.ne.s32.totalorder %s56, %s58
    %p65 = scmp.eq.s32.totalorder %s20, 3
    %p66 = por %p64, %p65
    %p67 = scmp.ne.s32.totalorder %s58, %s59
    %p68 = scmp.eq.s32.totalorder %s20, 0
    %p69 = por %p67, %p68
    %p70 = scmp.ne.s32.totalorder %s58, %s59
    %p71 = scmp.eq.s32.totalorder %s21, 3
    %p72 = por %p70, %p71
    %p74 = scmp.ne.s32.totalorder %s59, %s73
    %p75 = scmp.eq.s32.totalorder %s21, 0
    %p76 = por %p74, %p75
    %s78 = sadd.s32 %s77, 1
    %p81 = scmp.eq.s32.totalorder %s15, 3
    %p82 = scmp.ne.s32.totalorder %s77, %s79
    %p83 = scmp.eq.s32.totalorder %s15, 0
    %p84 = por %p82, %p83
    %p85 = scmp.ne.s32.totalorder %s77, %s79
    %p86 = scmp.eq.s32.totalorder %s20, 3
    %p87 = por %p85, %p86
    %p88 = scmp.ne.s32.totalorder %s79, %s80
    %p89 = scmp.eq.s32.totalorder %s20, 0
    %p90 = por %p88, %p89
    %p91 = scmp.ne.s32.totalorder %s79, %s80
    %p92 = scmp.eq.s32.totalorder %s21, 3
    %p93 = por %p91, %p92
    %p95 = scmp.ne.s32.totalorder %s80, %s94
    %p96 = scmp.eq.s32.totalorder %s21, 0
    %p97 = por %p95, %p96
    %s99 = sadd.s32 %s98, 1
    %p102 = scmp.eq.s32.totalorder %s15, 3
    %p103 = scmp.ne.s32.totalorder %s98, %s100
    %p104 = scmp.eq.s32.totalorder %s15, 0
    %p105 = por %p103, %p104
    %p106 = scmp.ne.s32.totalorder %s98, %s100
    %p107 = scmp.eq.s32.totalorder %s20, 3
    %p108 = por %p106, %p107
    %p109 = scmp.ne.s32.totalorder %s100, %s101
    %p110 = scmp.eq.s32.totalorder %s20, 0
    %p111 = por %p109, %p110
    %p112 = scmp.ne.s32.totalorder %s100, %s101
    %p113 = scmp.eq.s32.totalorder %s21, 3
    %p114 = por %p112, %p113
    %p116 = scmp.ne.s32.totalorder %s101, %s115
    %p117 = scmp.eq.s32.totalorder %s21, 0
    %p118 = por %p116, %p117
    %s119 = ssub.s32 %s23, %s30
    %p120 = scmp.eq.s32.totalorder %s119, 0
    %s122 = sadd.s32 %s121, 1
    %s123 = scalar_select %p120, %s121, %s122
    %p126 = pneg %p120
    %p127 = scmp.eq.s32.totalorder %s15, 3
    %p128 = por %p126, %p127
    %p129 = scmp.ne.s32.totalorder %s121, %s124
    %p130 = scmp.eq.s32.totalorder %s15, 0
    %p131 = por %p129, %p130
    %p132 = scmp.ne.s32.totalorder %s121, %s124
    %p133 = scmp.eq.s32.totalorder %s20, 3
    %p134 = por %p132, %p133
    %p135 = scmp.ne.s32.totalorder %s124, %s125
    %p136 = scmp.eq.s32.totalorder %s20, 0
    %p137 = por %p135, %p136
    %p138 = scmp.ne.s32.totalorder %s124, %s125
    %p139 = scmp.eq.s32.totalorder %s21, 3
    %p140 = por %p138, %p139
    %p142 = scmp.ne.s32.totalorder %s125, %s141
    %p143 = scmp.eq.s32.totalorder %s21, 0
    %p144 = por %p142, %p143
    %s145 = ssub.s32 %s22, %s34
    %s146 = ssub.s32 %s23, %s30
    %s147 = sor.u32 %s145, %s146
    %p148 = scmp.eq.s32.totalorder %s147, 0
    %s150 = sadd.s32 %s149, 1
    %s151 = scalar_select %p148, %s149, %s150
    %p154 = pneg %p148
    %p155 = scmp.eq.s32.totalorder %s15, 3
    %p156 = por %p154, %p155
    %p157 = scmp.ne.s32.totalorder %s149, %s152
    %p158 = scmp.eq.s32.totalorder %s15, 0
    %p159 = por %p157, %p158
    %p160 = scmp.ne.s32.totalorder %s149, %s152
    %p161 = scmp.eq.s32.totalorder %s20, 3
    %p162 = por %p160, %p161
    %p163 = scmp.ne.s32.totalorder %s152, %s153
    %p164 = scmp.eq.s32.totalorder %s20, 0
    %p165 = por %p163, %p164
    %p166 = scmp.ne.s32.totalorder %s152, %s153
    %p167 = scmp.eq.s32.totalorder %s21, 3
    %p168 = por %p166, %p167
    %p170 = scmp.ne.s32.totalorder %s153, %s169
    %p171 = scmp.eq.s32.totalorder %s21, 0
    %p172 = por %p170, %p171
    %s173 = ssub.s32 %s22, %s34
    %s174 = ssub.s32 %s23, %s30
    %s175 = sor.u32 %s173, %s174
    %p176 = scmp.eq.s32.totalorder %s175, 0
    %s178 = sadd.s32 %s177, 1
    %s179 = scalar_select %p176, %s177, %s178
    %p182 = pneg %p176
    %p183 = scmp.eq.s32.totalorder %s15, 3
    %p184 = por %p182, %p183
    %p185 = scmp.ne.s32.totalorder %s177, %s180
    %p186 = scmp.eq.s32.totalorder %s15, 0
    %p187 = por %p185, %p186
    %p188 = scmp.ne.s32.totalorder %s177, %s180
    %p189 = scmp.eq.s32.totalorder %s20, 3
    %p190 = por %p188, %p189
    %p191 = scmp.ne.s32.totalorder %s180, %s181
    %p192 = scmp.eq.s32.totalorder %s20, 0
    %p193 = por %p191, %p192
    %p194 = scmp.ne.s32.totalorder %s180, %s181
    %p195 = scmp.eq.s32.totalorder %s21, 3
    %p196 = por %p194, %p195
    %p198 = scmp.ne.s32.totalorder %s181, %s197
    %p199 = scmp.eq.s32.totalorder %s21, 0
    %p200 = por %p198, %p199
    %s201 = ssub.s32 %s22, %s34
    %s202 = ssub.s32 %s23, %s30
    %s203 = sor.u32 %s201, %s202
    %p204 = scmp.eq.s32.totalorder %s203, 0
    %s206 = sadd.s32 %s205, 1
    %s207 = scalar_select %p204, %s205, %s206
    %p210 = pneg %p204
    %p211 = scmp.eq.s32.totalorder %s15, 3
    %p212 = por %p210, %p211
    %p213 = scmp.ne.s32.totalorder %s205, %s208
    %p214 = scmp.eq.s32.totalorder %s15, 0
    %p215 = por %p213, %p214
    %p216 = scmp.ne.s32.totalorder %s205, %s208
    %p217 = scmp.eq.s32.totalorder %s20, 3
    %p218 = por %p216, %p217
    %p219 = scmp.ne.s32.totalorder %s208, %s209
    %p220 = scmp.eq.s32.totalorder %s20, 0
    %p221 = por %p219, %p220
    %p222 = scmp.ne.s32.totalorder %s208, %s209
    %p223 = scmp.eq.s32.totalorder %s21, 3
    %p224 = por %p222, %p223
    %p226 = scmp.ne.s32.totalorder %s209, %s225
    %p227 = scmp.eq.s32.totalorder %s21, 0
    %p228 = por %p226, %p227
    %s229 = ssub.s32 %s22, %s34
    %s230 = ssub.s32 %s23, %s30
    %s231 = sor.u32 %s229, %s230
    %p232 = scmp.eq.s32.totalorder %s231, 0
    %s234 = sadd.s32 %s233, 1
    %s235 = scalar_select %p232, %s233, %s234
    %p238 = pneg %p232
    %p239 = scmp.eq.s32.totalorder %s15, 3
    %p240 = por %p238, %p239
    %p241 = scmp.ne.s32.totalorder %s233, %s236
    %p242 = scmp.eq.s32.totalorder %s15, 0
    %p243 = por %p241, %p242
    %p244 = scmp.ne.s32.totalorder %s233, %s236
    %p245 = scmp.eq.s32.totalorder %s20, 3
    %p246 = por %p244, %p245
    %p247 = scmp.ne.s32.totalorder %s236, %s237
    %p248 = scmp.eq.s32.totalorder %s20, 0
    %p249 = por %p247, %p248
    %p250 = scmp.ne.s32.totalorder %s236, %s237
    %p251 = scmp.eq.s32.totalorder %s21, 3
    %p252 = por %p250, %p251
    %p254 = scmp.ne.s32.totalorder %s237, %s253
    %p255 = scmp.eq.s32.totalorder %s21, 0
    %p256 = por %p254, %p255
    %s258 = sadd.s32 %s257, 1
    %p261 = scmp.eq.s32.totalorder %s15, 3
    %p262 = scmp.ne.s32.totalorder %s257, %s259
    %p263 = scmp.eq.s32.totalorder %s15, 0
    %p264 = por %p262, %p263
    %p265 = scmp.ne.s32.totalorder %s257, %s259
    %p266 = scmp.eq.s32.totalorder %s20, 3
    %p267 = por %p265, %p266
    %p268 = scmp.ne.s32.totalorder %s259, %s260
    %p269 = scmp.eq.s32.totalorder %s20, 0
    %p270 = por %p268, %p269
    %p271 = scmp.ne.s32.totalorder %s259, %s260
    %p272 = scmp.eq.s32.totalorder %s21, 3
    %p273 = por %p271, %p272
    %p275 = scmp.ne.s32.totalorder %s260, %s274
    %p276 = scmp.eq.s32.totalorder %s21, 0
    %p277 = por %p275, %p276
    %p278 = scmp.le.s32.totalorder 1, %s15
    %p279 = scmp.lt.s32.totalorder %s15, 5
    %p280 = pnand %p278, %p279
    %p281 = pneg %p280
    // Predicated region
    $region9: #{bitwise_tasnet_forward.1} parent=5 // pred_check
      _
    $region10: #{bitwise_tasnet_forward.1} parent=5 // pred_check_branch
      %283 = sbr.rel (%p280) target = $region12
    $region11: #{bitwise_tasnet_forward.1} parent=5 // pred_region
      %s284 = ssub.s32 %s15, 1
      // Predicated region
      $region13: #{bitwise_tasnet_forward.1} parent=11 // pred_check
        %p285 = pneg %p48
      $region14: #{bitwise_tasnet_forward.1} parent=11 // pred_check_branch
        %287 = sbr.rel (%p285) target = $region16
      $region15: #{bitwise_tasnet_forward.1} parent=11 // pred_region
        _
      $region16: #{bitwise_tasnet_forward.1} parent=11 // pred_fallthru
        _
      // Predicated region
      $region17: #{bitwise_tasnet_forward.1} parent=11 // pred_check
        %p288 = pneg %p69
      $region18: #{bitwise_tasnet_forward.1} parent=11 // pred_check_branch
        %290 = sbr.rel (%p288) target = $region20
      $region19: #{bitwise_tasnet_forward.1} parent=11 // pred_region
        _
      $region20: #{bitwise_tasnet_forward.1} parent=11 // pred_fallthru
        _
      // Predicated region
      $region21: #{bitwise_tasnet_forward.1} parent=11 // pred_check
        %p291 = pneg %p90
      $region22: #{bitwise_tasnet_forward.1} parent=11 // pred_check_branch
        %293 = sbr.rel (%p291) target = $region24
      $region23: #{bitwise_tasnet_forward.1} parent=11 // pred_region
        _
      $region24: #{bitwise_tasnet_forward.1} parent=11 // pred_fallthru
        _
      // Predicated region
      $region25: #{bitwise_tasnet_forward.1} parent=11 // pred_check
        %p294 = pneg %p111
      $region26: #{bitwise_tasnet_forward.1} parent=11 // pred_check_branch
        %296 = sbr.rel (%p294) target = $region28
      $region27: #{bitwise_tasnet_forward.1} parent=11 // pred_region
        _
      $region28: #{bitwise_tasnet_forward.1} parent=11 // pred_fallthru
        _
    $region12: #{bitwise_tasnet_forward.1} parent=5 // pred_fallthru
      _
    %p297 = scmp.lt.s32.totalorder %s15, 4
    // Predicated region
    $region29: #{bitwise_tasnet_forward.1} parent=5 // pred_check
      %p298 = pneg %p297
    $region30: #{bitwise_tasnet_forward.1} parent=5 // pred_check_branch
      %300 = sbr.rel (%p298) target = $region32
    $region31: #{bitwise_tasnet_forward.1} parent=5 // pred_region
      // Predicated region
      $region33: #{bitwise_tasnet_forward.1} parent=31 // pred_check
        %p301 = pneg %p131
      $region34: #{bitwise_tasnet_forward.1} parent=31 // pred_check_branch
        %303 = sbr.rel (%p301) target = $region36
      $region35: #{bitwise_tasnet_forward.1} parent=31 // pred_region
        %p304 = scmp.lt.s32.totalorder %s23, 1
        %s305 = scalar_select %p304, %s23, 1
        %s306 = smul.addr %s305, 4
        %s307 = scalar_lea.vmem %s4, %s306
      $region36: #{bitwise_tasnet_forward.1} parent=31 // pred_fallthru
        _
      // Predicated region
      $region37: #{bitwise_tasnet_forward.1} parent=31 // pred_check
        %p308 = pneg %p159
      $region38: #{bitwise_tasnet_forward.1} parent=31 // pred_check_branch
        %310 = sbr.rel (%p308) target = $region40
      $region39: #{bitwise_tasnet_forward.1} parent=31 // pred_region
        %p311 = scmp.lt.s32.totalorder %s22, 1
        %s312 = scalar_select %p311, %s22, 1
        %p313 = scmp.lt.s32.totalorder %s23, 1
        %s314 = scalar_select %p313, %s23, 1
        %s315 = smul.addr %s314, 8
        %s316 = smul.addr %s312, 16
        %s317 = sadd.s32 %s315, %s316
        %s318 = smul.addr %s317, 4
        %s319 = scalar_lea.vmem %s5, %s318
      $region40: #{bitwise_tasnet_forward.1} parent=31 // pred_fallthru
        _
      // Predicated region
      $region41: #{bitwise_tasnet_forward.1} parent=31 // pred_check
        %p320 = pneg %p187
      $region42: #{bitwise_tasnet_forward.1} parent=31 // pred_check_branch
        %322 = sbr.rel (%p320) target = $region44
      $region43: #{bitwise_tasnet_forward.1} parent=31 // pred_region
        %p323 = scmp.lt.s32.totalorder %s22, 1
        %s324 = scalar_select %p323, %s22, 1
        %p325 = scmp.lt.s32.totalorder %s23, 1
        %s326 = scalar_select %p325, %s23, 1
        %s327 = smul.addr %s326, 8
        %s328 = smul.addr %s324, 16
        %s329 = sadd.s32 %s327, %s328
        %s330 = smul.addr %s329, 4
        %s331 = scalar_lea.vmem %s6, %s330
      $region44: #{bitwise_tasnet_forward.1} parent=31 // pred_fallthru
        _
      // Predicated region
      $region45: #{bitwise_tasnet_forward.1} parent=31 // pred_check
        %p332 = pneg %p215
      $region46: #{bitwise_tasnet_forward.1} parent=31 // pred_check_branch
        %334 = sbr.rel (%p332) target = $region48
      $region47: #{bitwise_tasnet_forward.1} parent=31 // pred_region
        %p335 = scmp.lt.s32.totalorder %s22, 1
        %s336 = scalar_select %p335, %s22, 1
        %p337 = scmp.lt.s32.totalorder %s23, 1
        %s338 = scalar_select %p337, %s23, 1
        %s339 = smul.addr %s338, 8
        %s340 = smul.addr %s336, 16
        %s341 = sadd.s32 %s339, %s340
        %s342 = smul.addr %s341, 8
        %s343 = scalar_lea.vmem %s7, %s342
      $region48: #{bitwise_tasnet_forward.1} parent=31 // pred_fallthru
        _
      // Predicated region
      $region49: #{bitwise_tasnet_forward.1} parent=31 // pred_check
        %p344 = pneg %p243
      $region50: #{bitwise_tasnet_forward.1} parent=31 // pred_check_branch
        %346 = sbr.rel (%p344) target = $region52
      $region51: #{bitwise_tasnet_forward.1} parent=31 // pred_region
        %p347 = scmp.lt.s32.totalorder %s22, 1
        %s348 = scalar_select %p347, %s22, 1
        %p349 = scmp.lt.s32.totalorder %s23, 1
        %s350 = scalar_select %p349, %s23, 1
        %s351 = smul.addr %s350, 8
        %s352 = smul.addr %s348, 16
        %s353 = sadd.s32 %s351, %s352
        %s354 = smul.addr %s353, 8
        %s355 = scalar_lea.vmem %s8, %s354
      $region52: #{bitwise_tasnet_forward.1} parent=31 // pred_fallthru
        _
    $region32: #{bitwise_tasnet_forward.1} parent=5 // pred_fallthru
      _
    %p356 = scmp.le.s32.totalorder 1, %s15
    %p357 = scmp.lt.s32.totalorder %s15, 5
    %p358 = pnand %p356, %p357
    %p359 = pneg %p358
    // Predicated region
    $region53: #{bitwise_tasnet_forward.1} parent=5 // pred_check
      _
    $region54: #{bitwise_tasnet_forward.1} parent=5 // pred_check_branch
      %361 = sbr.rel (%p358) target = $region56
    $region55: #{bitwise_tasnet_forward.1} parent=5 // pred_region
      %s362 = ssub.s32 %s15, 1
      %p363 = pneg %p48
      %p364 = pneg %p45
      %p365 = pneg %p69
      %p366 = pneg %p66
      %p367 = pneg %p90
      %p368 = pneg %p87
      %p369 = pneg %p111
      %p370 = pneg %p108
      %p371 = scmp.lt.s32.totalorder %s25, 1
      %s372 = scalar_select %p371, %s25, 1
      %s373 = smul.addr %s372, 4
      %s374 = scalar_lea.vmem %s4, %s373
      %p375 = pneg %p137
      %p376 = pneg %p134
      %p377 = scmp.lt.s32.totalorder %s24, 1
      %s378 = scalar_select %p377, %s24, 1
      %p379 = scmp.lt.s32.totalorder %s25, 1
      %s380 = scalar_select %p379, %s25, 1
      %s381 = smul.addr %s380, 8
      %s382 = smul.addr %s378, 16
      %s383 = sadd.s32 %s381, %s382
      %s384 = smul.addr %s383, 4
      %s385 = scalar_lea.vmem %s5, %s384
      %p386 = pneg %p165
      %p387 = pneg %p162
      %p388 = scmp.lt.s32.totalorder %s24, 1
      %s389 = scalar_select %p388, %s24, 1
      %p390 = scmp.lt.s32.totalorder %s25, 1
      %s391 = scalar_select %p390, %s25, 1
      %s392 = smul.addr %s391, 8
      %s393 = smul.addr %s389, 16
      %s394 = sadd.s32 %s392, %s393
      %s395 = smul.addr %s394, 4
      %s396 = scalar_lea.vmem %s6, %s395
      %p397 = pneg %p193
      %p398 = pneg %p190
      %p399 = scmp.lt.s32.totalorder %s24, 1
      %s400 = scalar_select %p399, %s24, 1
      %p401 = scmp.lt.s32.totalorder %s25, 1
      %s402 = scalar_select %p401, %s25, 1
      %s403 = smul.addr %s402, 8
      %s404 = smul.addr %s400, 16
      %s405 = sadd.s32 %s403, %s404
      %s406 = smul.addr %s405, 8
      %s407 = scalar_lea.vmem %s7, %s406
      %p408 = pneg %p221
      %p409 = pneg %p218
      %p410 = scmp.lt.s32.totalorder %s24, 1
      %s411 = scalar_select %p410, %s24, 1
      %p412 = scmp.lt.s32.totalorder %s25, 1
      %s413 = scalar_select %p412, %s25, 1
      %s414 = smul.addr %s413, 8
      %s415 = smul.addr %s411, 16
      %s416 = sadd.s32 %s414, %s415
      %s417 = smul.addr %s416, 8
      %s418 = scalar_lea.vmem %s8, %s417
      %p419 = pneg %p249
      %p420 = pneg %p246
      %p421 = pneg %p270
      %p422 = pneg %p267
      %p423 = scmp.lt.s32.totalorder %s25, 1
      %s424 = scalar_select %p423, %s25, 1
      %s425 = smul.addr %s424, 4
      %s426 = scalar_lea.vmem %s4, %s425
      %p427 = scmp.lt.s32.totalorder %s24, 1
      %s428 = scalar_select %p427, %s24, 1
      %p429 = scmp.lt.s32.totalorder %s25, 1
      %s430 = scalar_select %p429, %s25, 1
      %s431 = smul.addr %s430, 8
      %s432 = smul.addr %s428, 16
      %s433 = sadd.s32 %s431, %s432
      %s434 = smul.addr %s433, 4
      %s435 = scalar_lea.vmem %s5, %s434
      %p436 = scmp.lt.s32.totalorder %s24, 1
      %s437 = scalar_select %p436, %s24, 1
      %p438 = scmp.lt.s32.totalorder %s25, 1
      %s439 = scalar_select %p438, %s25, 1
      %s440 = smul.addr %s439, 8
      %s441 = smul.addr %s437, 16
      %s442 = sadd.s32 %s440, %s441
      %s443 = smul.addr %s442, 4
      %s444 = scalar_lea.vmem %s6, %s443
      %p445 = scmp.lt.s32.totalorder %s24, 1
      %s446 = scalar_select %p445, %s24, 1
      %p447 = scmp.lt.s32.totalorder %s25, 1
      %s448 = scalar_select %p447, %s25, 1
      %s449 = smul.addr %s448, 8
      %s450 = smul.addr %s446, 16
      %s451 = sadd.s32 %s449, %s450
      %s452 = smul.addr %s451, 8
      %s453 = scalar_lea.vmem %s7, %s452
      %p454 = scmp.lt.s32.totalorder %s24, 1
      %s455 = scalar_select %p454, %s24, 1
      %p456 = scmp.lt.s32.totalorder %s25, 1
      %s457 = scalar_select %p456, %s25, 1
      %s458 = smul.addr %s457, 8
      %s459 = smul.addr %s455, 16
      %s460 = sadd.s32 %s458, %s459
      %s461 = smul.addr %s460, 8
      %s462 = scalar_lea.vmem %s8, %s461
      %p464 = scmp.eq.s32.totalorder %s24, 0
      %p465 = scmp.eq.s32.totalorder %s25, 0
      %p466 = pnand %p464, %p465
      %p467 = pneg %p466
      %p468 = scmp.eq.s32.totalorder %s24, 1
      %p469 = scmp.eq.s32.totalorder %s25, 1
      %p470 = pnand %p468, %p469
      %p471 = pneg %p470
      // Predicated region
      $region57: #{bitwise_tasnet_forward.1} parent=55 // pred_check
        _
      $region58: #{bitwise_tasnet_forward.1} parent=55 // pred_check_branch
        %473 = sbr.rel (%p466) target = $region60
      $region59: #{bitwise_tasnet_forward.1} parent=55 // pred_region
        %v474 = vld [vmem:[%s1] sm:$0xf]
        %v475 = vld [vmem:[%s1 + $0x4] sm:$0xf]
        %v476 = vld [vmem:[%s1 + $0x8] sm:$0xf]
        %v477 = vld [vmem:[%s1 + $0xc] sm:$0xf]
        %v478 = vld [vmem:[%s1 + $0x10] sm:$0xf]
        %v479 = vld [vmem:[%s1 + $0x14] sm:$0xf]
        %v480 = vld [vmem:[%s1 + $0x18] sm:$0xf]
        %v481 = vld [vmem:[%s1 + $0x1c] sm:$0xf]
        %v482 = vld [vmem:[%s0] sm:$0xf]
        %v491 = vunpack.c.l.b16 %v474
        %v492 = vunpack.c.l.b16 %v475
        %v493 = vunpack.c.l.b16 %v476
        %v494 = vunpack.c.l.b16 %v477
        %v495 = vunpack.c.l.b16 %v478
        %v496 = vunpack.c.l.b16 %v479
        %v497 = vunpack.c.l.b16 %v480
        %v498 = vunpack.c.l.b16 %v481
        %v499 = vpack.c.b16 %v492, %v491
        %v500 = vpack.c.b16 %v494, %v493
        %v501 = vpack.c.b16 %v496, %v495
        %v502 = vpack.c.b16 %v498, %v497
        %vm503 = vcmask 64512
        %v505 = vsel %vm503, %v499, 0
        %v508 = vsel %vm503, %v500, 0
        %v511 = vsel %vm503, %v501, 0
        %v514 = vsel %vm503, %v502, 0
        %vm516 = vcmask 1043456
        %v518 = vsel %vm516, %v482, 0
        %520 = vmatprep.subr.bf16.mxu0 0
        %521 = vmatpush1.bf16.msra.mxu0 %v518
        %522 = vmatprep.subr.bf16.mxu0 0
        %523 = vmatpush1.bf16.msra.mxu0 0
        %524 = vmatprep.subr.bf16.mxu0 0
        %525 = vmatpush1.bf16.msra.mxu0 0
        %526 = vmatprep.subr.bf16.mxu0 0
        %527 = vmatpush1.bf16.msra.mxu0 0
        %528 = vmatprep.subr.bf16.mxu0 0
        %529 = vmatpush1.bf16.msra.mxu0 0
        %530 = vmatprep.subr.bf16.mxu0 0
        %531 = vmatpush1.bf16.msra.mxu0 0
        %532 = vmatprep.subr.bf16.mxu0 0
        %533 = vmatpush1.bf16.msra.mxu0 0
        %534 = vmatprep.subr.bf16.mxu0 0
        %535 = vmatpush1.bf16.msra.mxu0 0
        %536 = vmatprep.subr.bf16.mxu0 0
        %537 = vmatpush1.bf16.msra.mxu0 0
        %538 = vmatprep.subr.bf16.mxu0 0
        %539 = vmatpush1.bf16.msra.mxu0 0
        %540 = vmatprep.subr.bf16.mxu0 0
        %541 = vmatpush1.bf16.msra.mxu0 0
        %542 = vmatprep.subr.bf16.mxu0 0
        %543 = vmatpush1.bf16.msra.mxu0 0
        %544 = vmatprep.subr.bf16.mxu0 0
        %545 = vmatpush1.bf16.msra.mxu0 0
        %546 = vmatprep.subr.bf16.mxu0 0
        %547 = vmatpush1.bf16.msra.mxu0 0
        %548 = vmatprep.subr.bf16.mxu0 0
        %549 = vmatpush1.bf16.msra.mxu0 0
        %550 = vmatprep.subr.bf16.mxu0 0
        %551 = vmatpush1.bf16.msra.mxu0 0
        %552 = vmatprep.mubr.bf16.mxu0 0
        %553 = vmatmul.mubr.bf16.gmra.mrb[0].mxu0 %v505
        %v554 = vpop.f32.mrb[0].mxu0
        %v555 = vadd.f32 0.0, %v554
        %v556 = vpop.f32.mrb[0].mxu0
        %v557 = vpop.f32.mrb[0].mxu0
        %v558 = vadd.f32 0.0, %v557
        %v559 = vpop.f32.mrb[0].mxu0
        %560 = vmatprep.mubr.bf16.mxu0 0
        %561 = vmatmul.mubr.bf16.gmra.mrb[0].mxu0 %v508
        %v562 = vpop.f32.mrb[0].mxu0
        %v563 = vadd.f32 0.0, %v562
        %v564 = vpop.f32.mrb[0].mxu0
        %v565 = vpop.f32.mrb[0].mxu0
        %v566 = vadd.f32 0.0, %v565
        %v567 = vpop.f32.mrb[0].mxu0
        %568 = vmatprep.mubr.bf16.mxu0 0
        %569 = vmatmul.mubr.bf16.gmra.mrb[0].mxu0 %v511
        %v570 = vpop.f32.mrb[0].mxu0
        %v571 = vadd.f32 0.0, %v570
        %v572 = vpop.f32.mrb[0].mxu0
        %v573 = vpop.f32.mrb[0].mxu0
        %v574 = vadd.f32 0.0, %v573
        %v575 = vpop.f32.mrb[0].mxu0
        %576 = vmatprep.mubr.bf16.mxu0 0
        %577 = vmatmul.mubr.bf16.gmra.mrb[0].mxu0 %v514
        %v578 = vpop.f32.mrb[0].mxu0
        %v579 = vadd.f32 0.0, %v578
        %v580 = vpop.f32.mrb[0].mxu0
        %v581 = vpop.f32.mrb[0].mxu0
        %v582 = vadd.f32 0.0, %v581
        %v583 = vpop.f32.mrb[0].mxu0
        %584 = vdwg.mxu0
        %v585 = vld [vmem:[%s3] sm:$0xff]
        %v586 = vld [vmem:[%s3 + $0x8] sm:$0xff]
        %v587 = vld [vmem:[%s3 + $0x10] sm:$0xff]
        %v588 = vld [vmem:[%s3 + $0x18] sm:$0xff]
        %v589 = vld [vmem:[%s3 + $0x20] sm:$0xff]
        %v590 = vld [vmem:[%s3 + $0x28] sm:$0xff]
        %v591 = vld [vmem:[%s3 + $0x30] sm:$0xff]
        %v592 = vld [vmem:[%s3 + $0x38] sm:$0xff]
        %vm593 = vcmp.ge.f32.partialorder %v555, 0.0
        %vm594 = vcmp.ge.f32.partialorder %v558, 0.0
        %vm595 = vcmp.ge.f32.partialorder %v563, 0.0
        %vm596 = vcmp.ge.f32.partialorder %v566, 0.0
        %vm597 = vcmp.ge.f32.partialorder %v571, 0.0
        %vm598 = vcmp.ge.f32.partialorder %v574, 0.0
        %vm599 = vcmp.ge.f32.partialorder %v579, 0.0
        %vm600 = vcmp.ge.f32.partialorder %v582, 0.0
        %602 = vset.pattern.permute.xlu0 2
        %603 = vperm.xlu0 %602, %v585
        %v604 = vpop.permute.xlu0 %603
        %607 = vset.pattern.permute.xlu0 2
        %608 = vperm.xlu0 %607, %v586
        %v609 = vpop.permute.xlu0 %608
        %612 = vset.pattern.permute.xlu0 2
        %613 = vperm.xlu0 %612, %v587
        %v614 = vpop.permute.xlu0 %613
        %617 = vset.pattern.permute.xlu0 2
        %618 = vperm.xlu0 %617, %v588
        %v619 = vpop.permute.xlu0 %618
        %622 = vset.pattern.permute.xlu0 2
        %623 = vperm.xlu0 %622, %v589
        %v624 = vpop.permute.xlu0 %623
        %627 = vset.pattern.permute.xlu0 2
        %628 = vperm.xlu0 %627, %v590
        %v629 = vpop.permute.xlu0 %628
        %632 = vset.pattern.permute.xlu0 2
        %633 = vperm.xlu0 %632, %v591
        %v634 = vpop.permute.xlu0 %633
        %637 = vset.pattern.permute.xlu0 2
        %638 = vperm.xlu0 %637, %v592
        %v639 = vpop.permute.xlu0 %638
        %v641 = vmul.f32 %v604, %v555
        %v642 = vmul.f32 %v609, %v558
        %v643 = vmul.f32 %v614, %v563
        %v644 = vmul.f32 %v619, %v566
        %v645 = vmul.f32 %v624, %v571
        %v646 = vmul.f32 %v629, %v574
        %v647 = vmul.f32 %v634, %v579
        %v648 = vmul.f32 %v639, %v582
        %v649 = vsel %vm593, %v555, %v641
        %v650 = vsel %vm594, %v558, %v642
        %v651 = vsel %vm595, %v563, %v643
        %v652 = vsel %vm596, %v566, %v644
        %v653 = vsel %vm597, %v571, %v645
        %v654 = vsel %vm598, %v574, %v646
        %v655 = vsel %vm599, %v579, %v647
        %v656 = vsel %vm600, %v582, %v648
        %657 = vst [vmem:[#allocation2] sm:$0xff] %v649
        %658 = vst [vmem:[#allocation2 + $0x8] sm:$0xff] %v650
        %659 = vst [vmem:[#allocation2 + $0x10] sm:$0xff] %v651
        %660 = vst [vmem:[#allocation2 + $0x18] sm:$0xff] %v652
        %661 = vst [vmem:[#allocation2 + $0x20] sm:$0xff] %v653
        %662 = vst [vmem:[#allocation2 + $0x28] sm:$0xff] %v654
        %663 = vst [vmem:[#allocation2 + $0x30] sm:$0xff] %v655
        %664 = vst [vmem:[#allocation2 + $0x38] sm:$0xff] %v656
        %665 = vst [vmem:[#allocation3] sm:$0xff] %v649
        %666 = vst [vmem:[#allocation3 + $0x8] sm:$0xff] %v650
        %667 = vst [vmem:[#allocation3 + $0x10] sm:$0xff] %v651
        %668 = vst [vmem:[#allocation3 + $0x18] sm:$0xff] %v652
        %669 = vst [vmem:[#allocation3 + $0x20] sm:$0xff] %v653
        %670 = vst [vmem:[#allocation3 + $0x28] sm:$0xff] %v654
        %671 = vst [vmem:[#allocation3 + $0x30] sm:$0xff] %v655
        %672 = vst [vmem:[#allocation3 + $0x38] sm:$0xff] %v656
      $region60: #{bitwise_tasnet_forward.1} parent=55 // pred_fallthru
        _
      %v673 = vld [vmem:[#allocation3] sm:$0xff]
      %v674 = vld [vmem:[#allocation3 + $0x8] sm:$0xff]
      %v675 = vld [vmem:[#allocation3 + $0x10] sm:$0xff]
      %v676 = vld [vmem:[#allocation3 + $0x18] sm:$0xff]
      %v677 = vld [vmem:[#allocation3 + $0x20] sm:$0xff]
      %v678 = vld [vmem:[#allocation3 + $0x28] sm:$0xff]
      %v679 = vld [vmem:[#allocation3 + $0x30] sm:$0xff]
      %v680 = vld [vmem:[#allocation3 + $0x38] sm:$0xff]
      %v681 = vld [vmem:[%s453] sm:$0xff]
      %v682 = vld [vmem:[%s453 + $0x8] sm:$0xff]
      %v683 = vld [vmem:[%s453 + $0x10] sm:$0xff]
      %v684 = vld [vmem:[%s453 + $0x18] sm:$0xff]
      %v685 = vld [vmem:[%s453 + $0x20] sm:$0xff]
      %v686 = vld [vmem:[%s453 + $0x28] sm:$0xff]
      %v687 = vld [vmem:[%s453 + $0x30] sm:$0xff]
      %v688 = vld [vmem:[%s453 + $0x38] sm:$0xff]
      %689 = vadd.xlane.f32.xlu0 %v673
      %v690 = vpop.xlane.xlu0 %689
      %691 = vadd.xlane.f32.xlu0 %v674
      %v692 = vpop.xlane.xlu0 %691
      %693 = vadd.xlane.f32.xlu0 %v675
      %v694 = vpop.xlane.xlu0 %693
      %695 = vadd.xlane.f32.xlu0 %v676
      %v696 = vpop.xlane.xlu0 %695
      %697 = vadd.xlane.f32.xlu0 %v677
      %v698 = vpop.xlane.xlu0 %697
      %699 = vadd.xlane.f32.xlu0 %v678
      %v700 = vpop.xlane.xlu0 %699
      %701 = vadd.xlane.f32.xlu0 %v679
      %v702 = vpop.xlane.xlu0 %701
      %703 = vadd.xlane.f32.xlu0 %v680
      %v704 = vpop.xlane.xlu0 %703
      %v705 = vmul.f32 %v690, 0.0078125
      %v706 = vmul.f32 %v692, 0.0078125
      %v707 = vmul.f32 %v694, 0.0078125
      %v708 = vmul.f32 %v696, 0.0078125
      %v709 = vmul.f32 %v698, 0.0078125
      %v710 = vmul.f32 %v700, 0.0078125
      %v711 = vmul.f32 %v702, 0.0078125
      %v712 = vmul.f32 %v704, 0.0078125
      %v713 = vmul.f32 %v673, %v673
      %v714 = vmul.f32 %v674, %v674
      %v715 = vmul.f32 %v675, %v675
      %v716 = vmul.f32 %v676, %v676
      %v717 = vmul.f32 %v677, %v677
      %v718 = vmul.f32 %v678, %v678
      %v719 = vmul.f32 %v679, %v679
      %v720 = vmul.f32 %v680, %v680
      %721 = vadd.xlane.f32.xlu0 %v713
      %v722 = vpop.xlane.xlu0 %721
      %723 = vadd.xlane.f32.xlu0 %v714
      %v724 = vpop.xlane.xlu0 %723
      %725 = vadd.xlane.f32.xlu0 %v715
      %v726 = vpop.xlane.xlu0 %725
      %727 = vadd.xlane.f32.xlu0 %v716
      %v728 = vpop.xlane.xlu0 %727
      %729 = vadd.xlane.f32.xlu0 %v717
      %v730 = vpop.xlane.xlu0 %729
      %731 = vadd.xlane.f32.xlu0 %v718
      %v732 = vpop.xlane.xlu0 %731
      %733 = vadd.xlane.f32.xlu0 %v719
      %v734 = vpop.xlane.xlu0 %733
      %735 = vadd.xlane.f32.xlu0 %v720
      %v736 = vpop.xlane.xlu0 %735
      %v737 = vmul.f32 %v722, 0.0078125
      %v738 = vmul.f32 %v724, 0.0078125
      %v739 = vmul.f32 %v726, 0.0078125
      %v740 = vmul.f32 %v728, 0.0078125
      %v741 = vmul.f32 %v730, 0.0078125
      %v742 = vmul.f32 %v732, 0.0078125
      %v743 = vmul.f32 %v734, 0.0078125
      %v744 = vmul.f32 %v736, 0.0078125
      %v745 = vmul.f32 %v705, %v705
      %v746 = vmul.f32 %v706, %v706
      %v747 = vmul.f32 %v707, %v707
      %v748 = vmul.f32 %v708, %v708
      %v749 = vmul.f32 %v709, %v709
      %v750 = vmul.f32 %v710, %v710
      %v751 = vmul.f32 %v711, %v711
      %v752 = vmul.f32 %v712, %v712
      %v753 = vsub.f32 %v737, %v745
      %v754 = vsub.f32 %v738, %v746
      %v755 = vsub.f32 %v739, %v747
      %v756 = vsub.f32 %v740, %v748
      %v757 = vsub.f32 %v741, %v749
      %v758 = vsub.f32 %v742, %v750
      %v759 = vsub.f32 %v743, %v751
      %v760 = vsub.f32 %v744, %v752
      %v761 = vsub.f32 %v673, %v705
      %v762 = vsub.f32 %v674, %v706
      %v763 = vsub.f32 %v675, %v707
      %v764 = vsub.f32 %v676, %v708
      %v765 = vsub.f32 %v677, %v709
      %v766 = vsub.f32 %v678, %v710
      %v767 = vsub.f32 %v679, %v711
      %v768 = vsub.f32 %v680, %v712
      %770 = vset.pattern.permute.xlu0 0
      %771 = vperm.xlu0 %770, %v681
      %v772 = vpop.permute.xlu0 %771
      %775 = vset.pattern.permute.xlu0 0
      %776 = vperm.xlu0 %775, %v682
      %v777 = vpop.permute.xlu0 %776
      %780 = vset.pattern.permute.xlu0 0
      %781 = vperm.xlu0 %780, %v683
      %v782 = vpop.permute.xlu0 %781
      %785 = vset.pattern.permute.xlu0 0
      %786 = vperm.xlu0 %785, %v684
      %v787 = vpop.permute.xlu0 %786
      %790 = vset.pattern.permute.xlu0 0
      %791 = vperm.xlu0 %790, %v685
      %v792 = vpop.permute.xlu0 %791
      %795 = vset.pattern.permute.xlu0 0
      %796 = vperm.xlu0 %795, %v686
      %v797 = vpop.permute.xlu0 %796
      %800 = vset.pattern.permute.xlu0 0
      %801 = vperm.xlu0 %800, %v687
      %v802 = vpop.permute.xlu0 %801
      %805 = vset.pattern.permute.xlu0 0
      %806 = vperm.xlu0 %805, %v688
      %v807 = vpop.permute.xlu0 %806
      %v809 = vmul.f32 %v772, %v761
      %v810 = vmul.f32 %v777, %v762
      %v811 = vmul.f32 %v782, %v763
      %v812 = vmul.f32 %v787, %v764
      %v813 = vmul.f32 %v792, %v765
      %v814 = vmul.f32 %v797, %v766
      %v815 = vmul.f32 %v802, %v767
      %v816 = vmul.f32 %v807, %v768
      %v817 = vadd.f32 %v753, 1e-05
      %v818 = vadd.f32 %v754, 1e-05
      %v819 = vadd.f32 %v755, 1e-05
      %v820 = vadd.f32 %v756, 1e-05
      %v821 = vadd.f32 %v757, 1e-05
      %v822 = vadd.f32 %v758, 1e-05
      %v823 = vadd.f32 %v759, 1e-05
      %v824 = vadd.f32 %v760, 1e-05
      %v825 = vrsqrt.pop %v817
      %v826 = vrsqrt.pop %v818
      %v827 = vrsqrt.pop %v819
      %v828 = vrsqrt.pop %v820
      %v829 = vrsqrt.pop %v821
      %v830 = vrsqrt.pop %v822
      %v831 = vrsqrt.pop %v823
      %v832 = vrsqrt.pop %v824
      %v833 = vmul.f32 %v809, %v825
      %v834 = vmul.f32 %v810, %v826
      %v835 = vmul.f32 %v811, %v827
      %v836 = vmul.f32 %v812, %v828
      %v837 = vmul.f32 %v813, %v829
      %v838 = vmul.f32 %v814, %v830
      %v839 = vmul.f32 %v815, %v831
      %v840 = vmul.f32 %v816, %v832
      %841 = vset.pattern.permute.xlu0 1
      %842 = vperm.xlu0 %841, %v681
      %v843 = vpop.permute.xlu0 %842
      %845 = vset.pattern.permute.xlu0 1
      %846 = vperm.xlu0 %845, %v682
      %v847 = vpop.permute.xlu0 %846
      %849 = vset.pattern.permute.xlu0 1
      %850 = vperm.xlu0 %849, %v683
      %v851 = vpop.permute.xlu0 %850
      %853 = vset.pattern.permute.xlu0 1
      %854 = vperm.xlu0 %853, %v684
      %v855 = vpop.permute.xlu0 %854
      %857 = vset.pattern.permute.xlu0 1
      %858 = vperm.xlu0 %857, %v685
      %v859 = vpop.permute.xlu0 %858
      %861 = vset.pattern.permute.xlu0 1
      %862 = vperm.xlu0 %861, %v686
      %v863 = vpop.permute.xlu0 %862
      %865 = vset.pattern.permute.xlu0 1
      %866 = vperm.xlu0 %865, %v687
      %v867 = vpop.permute.xlu0 %866
      %869 = vset.pattern.permute.xlu0 1
      %870 = vperm.xlu0 %869, %v688
      %v871 = vpop.permute.xlu0 %870
      %v873 = vadd.f32 %v833, %v843
      %v874 = vadd.f32 %v834, %v847
      %v875 = vadd.f32 %v835, %v851
      %v876 = vadd.f32 %v836, %v855
      %v877 = vadd.f32 %v837, %v859
      %v878 = vadd.f32 %v838, %v863
      %v879 = vadd.f32 %v839, %v867
      %v880 = vadd.f32 %v840, %v871
      %v881 = vld [vmem:[%s435] sm:$0xf]
      %v882 = vld [vmem:[%s435 + $0x4] sm:$0xf]
      %v883 = vld [vmem:[%s435 + $0x8] sm:$0xf]
      %v884 = vld [vmem:[%s435 + $0xc] sm:$0xf]
      %v885 = vld [vmem:[%s435 + $0x10] sm:$0xf]
      %v886 = vld [vmem:[%s435 + $0x14] sm:$0xf]
      %v887 = vld [vmem:[%s435 + $0x18] sm:$0xf]
      %v888 = vld [vmem:[%s435 + $0x1c] sm:$0xf]
      %v889 = vpack.c.bf16 %v874, %v873
      %v890 = vpack.c.bf16 %v876, %v875
      %v891 = vpack.c.bf16 %v878, %v877
      %v892 = vpack.c.bf16 %v880, %v879
      %v901 = vunpack.c.l.b16 %v881
      %v902 = vunpack.c.l.b16 %v882
      %v903 = vunpack.c.l.b16 %v883
      %v904 = vunpack.c.l.b16 %v884
      %v905 = vunpack.c.l.b16 %v885
      %v906 = vunpack.c.l.b16 %v886
      %v907 = vunpack.c.l.b16 %v887
      %v908 = vunpack.c.l.b16 %v888
      %v909 = vpack.c.b16 %v902, %v901
      %v910 = vpack.c.b16 %v904, %v903
      %v911 = vpack.c.b16 %v906, %v905
      %v912 = vpack.c.b16 %v908, %v907
      %vm913 = vcmask 523264
      %v915 = vsel %vm913, %v909, 0
      %v918 = vsel %vm913, %v910, 0
      %v921 = vsel %vm913, %v911, 0
      %v924 = vsel %vm913, %v912, 0
      %926 = vmatprep.subr.bf16.mxu0 0
      %927 = vmatpush1.bf16.msra.mxu0 %v889
      %928 = vmatprep.subr.bf16.mxu0 0
      %929 = vmatpush1.bf16.msra.mxu0 %v890
      %930 = vmatprep.subr.bf16.mxu0 0
      %931 = vmatpush1.bf16.msra.mxu0 %v891
      %932 = vmatprep.subr.bf16.mxu0 0
      %933 = vmatpush1.bf16.msra.mxu0 %v892
      %934 = vmatprep.subr.bf16.mxu0 0
      %935 = vmatpush1.bf16.msra.mxu0 0
      %936 = vmatprep.subr.bf16.mxu0 0
      %937 = vmatpush1.bf16.msra.mxu0 0
      %938 = vmatprep.subr.bf16.mxu0 0
      %939 = vmatpush1.bf16.msra.mxu0 0
      %940 = vmatprep.subr.bf16.mxu0 0
      %941 = vmatpush1.bf16.msra.mxu0 0
      %942 = vmatprep.subr.bf16.mxu0 0
      %943 = vmatpush1.bf16.msra.mxu0 0
      %944 = vmatprep.subr.bf16.mxu0 0
      %945 = vmatpush1.bf16.msra.mxu0 0
      %946 = vmatprep.subr.bf16.mxu0 0
      %947 = vmatpush1.bf16.msra.mxu0 0
      %948 = vmatprep.subr.bf16.mxu0 0
      %949 = vmatpush1.bf16.msra.mxu0 0
      %950 = vmatprep.subr.bf16.mxu0 0
      %951 = vmatpush1.bf16.msra.mxu0 0
      %952 = vmatprep.subr.bf16.mxu0 0
      %953 = vmatpush1.bf16.msra.mxu0 0
      %954 = vmatprep.subr.bf16.mxu0 0
      %955 = vmatpush1.bf16.msra.mxu0 0
      %956 = vmatprep.subr.bf16.mxu0 0
      %957 = vmatpush1.bf16.msra.mxu0 0
      %958 = vmatprep.mubr.bf16.mxu0 0
      %959 = vmatmul.mubr.bf16.gmra.mrb[0].mxu0 %v915
      %v960 = vpop.f32.mrb[0].mxu0
      %v961 = vadd.f32 0.0, %v960
      %v962 = vpop.f32.mrb[0].mxu0
      %v963 = vpop.f32.mrb[0].mxu0
      %v964 = vadd.f32 0.0, %v963
      %v965 = vpop.f32.mrb[0].mxu0
      %966 = vmatprep.mubr.bf16.mxu0 0
      %967 = vmatmul.mubr.bf16.gmra.mrb[0].mxu0 %v918
      %v968 = vpop.f32.mrb[0].mxu0
      %v969 = vadd.f32 0.0, %v968
      %v970 = vpop.f32.mrb[0].mxu0
      %v971 = vpop.f32.mrb[0].mxu0
      %v972 = vadd.f32 0.0, %v971
      %v973 = vpop.f32.mrb[0].mxu0
      %974 = vmatprep.mubr.bf16.mxu0 0
      %975 = vmatmul.mubr.bf16.gmra.mrb[0].mxu0 %v921
      %v976 = vpop.f32.mrb[0].mxu0
      %v977 = vadd.f32 0.0, %v976
      %v978 = vpop.f32.mrb[0].mxu0
      %v979 = vpop.f32.mrb[0].mxu0
      %v980 = vadd.f32 0.0, %v979
      %v981 = vpop.f32.mrb[0].mxu0
      %982 = vmatprep.mubr.bf16.mxu0 0
      %983 = vmatmul.mubr.bf16.gmra.mrb[0].mxu0 %v924
      %v984 = vpop.f32.mrb[0].mxu0
      %v985 = vadd.f32 0.0, %v984
      %v986 = vpop.f32.mrb[0].mxu0
      %v987 = vpop.f32.mrb[0].mxu0
      %v988 = vadd.f32 0.0, %v987
      %v989 = vpop.f32.mrb[0].mxu0
      %990 = vdwg.mxu0
      %v991 = vld [vmem:[%s462] sm:$0xff]
      %v992 = vld [vmem:[%s462 + $0x8] sm:$0xff]
      %v993 = vld [vmem:[%s462 + $0x10] sm:$0xff]
      %v994 = vld [vmem:[%s462 + $0x18] sm:$0xff]
      %v995 = vld [vmem:[%s462 + $0x20] sm:$0xff]
      %v996 = vld [vmem:[%s462 + $0x28] sm:$0xff]
      %v997 = vld [vmem:[%s462 + $0x30] sm:$0xff]
      %v998 = vld [vmem:[%s462 + $0x38] sm:$0xff]
      %999 = vadd.xlane.f32.xlu0 %v961
      %v1000 = vpop.xlane.xlu0 %999
      %1001 = vadd.xlane.f32.xlu0 %v964
      %v1002 = vpop.xlane.xlu0 %1001
      %1003 = vadd.xlane.f32.xlu0 %v969
      %v1004 = vpop.xlane.xlu0 %1003
      %1005 = vadd.xlane.f32.xlu0 %v972
      %v1006 = vpop.xlane.xlu0 %1005
      %1007 = vadd.xlane.f32.xlu0 %v977
      %v1008 = vpop.xlane.xlu0 %1007
      %1009 = vadd.xlane.f32.xlu0 %v980
      %v1010 = vpop.xlane.xlu0 %1009
      %1011 = vadd.xlane.f32.xlu0 %v985
      %v1012 = vpop.xlane.xlu0 %1011
      %1013 = vadd.xlane.f32.xlu0 %v988
      %v1014 = vpop.xlane.xlu0 %1013
      %v1015 = vmul.f32 %v1000, 0.0078125
      %v1016 = vmul.f32 %v1002, 0.0078125
      %v1017 = vmul.f32 %v1004, 0.0078125
      %v1018 = vmul.f32 %v1006, 0.0078125
      %v1019 = vmul.f32 %v1008, 0.0078125
      %v1020 = vmul.f32 %v1010, 0.0078125
      %v1021 = vmul.f32 %v1012, 0.0078125
      %v1022 = vmul.f32 %v1014, 0.0078125
      %v1023 = vmul.f32 %v961, %v961
      %v1024 = vmul.f32 %v964, %v964
      %v1025 = vmul.f32 %v969, %v969
      %v1026 = vmul.f32 %v972, %v972
      %v1027 = vmul.f32 %v977, %v977
      %v1028 = vmul.f32 %v980, %v980
      %v1029 = vmul.f32 %v985, %v985
      %v1030 = vmul.f32 %v988, %v988
      %1031 = vadd.xlane.f32.xlu0 %v1023
      %v1032 = vpop.xlane.xlu0 %1031
      %1033 = vadd.xlane.f32.xlu0 %v1024
      %v1034 = vpop.xlane.xlu0 %1033
      %1035 = vadd.xlane.f32.xlu0 %v1025
      %v1036 = vpop.xlane.xlu0 %1035
      %1037 = vadd.xlane.f32.xlu0 %v1026
      %v1038 = vpop.xlane.xlu0 %1037
      %1039 = vadd.xlane.f32.xlu0 %v1027
      %v1040 = vpop.xlane.xlu0 %1039
      %1041 = vadd.xlane.f32.xlu0 %v1028
      %v1042 = vpop.xlane.xlu0 %1041
      %1043 = vadd.xlane.f32.xlu0 %v1029
      %v1044 = vpop.xlane.xlu0 %1043
      %1045 = vadd.xlane.f32.xlu0 %v1030
      %v1046 = vpop.xlane.xlu0 %1045
      %v1047 = vmul.f32 %v1032, 0.0078125
      %v1048 = vmul.f32 %v1034, 0.0078125
      %v1049 = vmul.f32 %v1036, 0.0078125
      %v1050 = vmul.f32 %v1038, 0.0078125
      %v1051 = vmul.f32 %v1040, 0.0078125
      %v1052 = vmul.f32 %v1042, 0.0078125
      %v1053 = vmul.f32 %v1044, 0.0078125
      %v1054 = vmul.f32 %v1046, 0.0078125
      %v1055 = vmul.f32 %v1015, %v1015
      %v1056 = vmul.f32 %v1016, %v1016
      %v1057 = vmul.f32 %v1017, %v1017
      %v1058 = vmul.f32 %v1018, %v1018
      %v1059 = vmul.f32 %v1019, %v1019
      %v1060 = vmul.f32 %v1020, %v1020
      %v1061 = vmul.f32 %v1021, %v1021
      %v1062 = vmul.f32 %v1022, %v1022
      %v1063 = vsub.f32 %v1047, %v1055
      %v1064 = vsub.f32 %v1048, %v1056
      %v1065 = vsub.f32 %v1049, %v1057
      %v1066 = vsub.f32 %v1050, %v1058
      %v1067 = vsub.f32 %v1051, %v1059
      %v1068 = vsub.f32 %v1052, %v1060
      %v1069 = vsub.f32 %v1053, %v1061
      %v1070 = vsub.f32 %v1054, %v1062
      %v1071 = vsub.f32 %v961, %v1015
      %v1072 = vsub.f32 %v964, %v1016
      %v1073 = vsub.f32 %v969, %v1017
      %v1074 = vsub.f32 %v972, %v1018
      %v1075 = vsub.f32 %v977, %v1019
      %v1076 = vsub.f32 %v980, %v1020
      %v1077 = vsub.f32 %v985, %v1021
      %v1078 = vsub.f32 %v988, %v1022
      %1080 = vset.pattern.permute.xlu0 0
      %1081 = vperm.xlu0 %1080, %v991
      %v1082 = vpop.permute.xlu0 %1081
      %1085 = vset.pattern.permute.xlu0 0
      %1086 = vperm.xlu0 %1085, %v992
      %v1087 = vpop.permute.xlu0 %1086
      %1090 = vset.pattern.permute.xlu0 0
      %1091 = vperm.xlu0 %1090, %v993
      %v1092 = vpop.permute.xlu0 %1091
      %1095 = vset.pattern.permute.xlu0 0
      %1096 = vperm.xlu0 %1095, %v994
      %v1097 = vpop.permute.xlu0 %1096
      %1100 = vset.pattern.permute.xlu0 0
      %1101 = vperm.xlu0 %1100, %v995
      %v1102 = vpop.permute.xlu0 %1101
      %1105 = vset.pattern.permute.xlu0 0
      %1106 = vperm.xlu0 %1105, %v996
      %v1107 = vpop.permute.xlu0 %1106
      %1110 = vset.pattern.permute.xlu0 0
      %1111 = vperm.xlu0 %1110, %v997
      %v1112 = vpop.permute.xlu0 %1111
      %1115 = vset.pattern.permute.xlu0 0
      %1116 = vperm.xlu0 %1115, %v998
      %v1117 = vpop.permute.xlu0 %1116
      %v1119 = vmul.f32 %v1082, %v1071
      %v1120 = vmul.f32 %v1087, %v1072
      %v1121 = vmul.f32 %v1092, %v1073
      %v1122 = vmul.f32 %v1097, %v1074
      %v1123 = vmul.f32 %v1102, %v1075
      %v1124 = vmul.f32 %v1107, %v1076
      %v1125 = vmul.f32 %v1112, %v1077
      %v1126 = vmul.f32 %v1117, %v1078
      %v1127 = vadd.f32 %v1063, 1e-05
      %v1128 = vadd.f32 %v1064, 1e-05
      %v1129 = vadd.f32 %v1065, 1e-05
      %v1130 = vadd.f32 %v1066, 1e-05
      %v1131 = vadd.f32 %v1067, 1e-05
      %v1132 = vadd.f32 %v1068, 1e-05
      %v1133 = vadd.f32 %v1069, 1e-05
      %v1134 = vadd.f32 %v1070, 1e-05
      %v1135 = vrsqrt.pop %v1127
      %v1136 = vrsqrt.pop %v1128
      %v1137 = vrsqrt.pop %v1129
      %v1138 = vrsqrt.pop %v1130
      %v1139 = vrsqrt.pop %v1131
      %v1140 = vrsqrt.pop %v1132
      %v1141 = vrsqrt.pop %v1133
      %v1142 = vrsqrt.pop %v1134
      %v1143 = vmul.f32 %v1119, %v1135
      %v1144 = vmul.f32 %v1120, %v1136
      %v1145 = vmul.f32 %v1121, %v1137
      %v1146 = vmul.f32 %v1122, %v1138
      %v1147 = vmul.f32 %v1123, %v1139
      %v1148 = vmul.f32 %v1124, %v1140
      %v1149 = vmul.f32 %v1125, %v1141
      %v1150 = vmul.f32 %v1126, %v1142
      %1151 = vset.pattern.permute.xlu0 1
      %1152 = vperm.xlu0 %1151, %v991
      %v1153 = vpop.permute.xlu0 %1152
      %1155 = vset.pattern.permute.xlu0 1
      %1156 = vperm.xlu0 %1155, %v992
      %v1157 = vpop.permute.xlu0 %1156
      %1159 = vset.pattern.permute.xlu0 1
      %1160 = vperm.xlu0 %1159, %v993
      %v1161 = vpop.permute.xlu0 %1160
      %1163 = vset.pattern.permute.xlu0 1
      %1164 = vperm.xlu0 %1163, %v994
      %v1165 = vpop.permute.xlu0 %1164
      %1167 = vset.pattern.permute.xlu0 1
      %1168 = vperm.xlu0 %1167, %v995
      %v1169 = vpop.permute.xlu0 %1168
      %1171 = vset.pattern.permute.xlu0 1
      %1172 = vperm.xlu0 %1171, %v996
      %v1173 = vpop.permute.xlu0 %1172
      %1175 = vset.pattern.permute.xlu0 1
      %1176 = vperm.xlu0 %1175, %v997
      %v1177 = vpop.permute.xlu0 %1176
      %1179 = vset.pattern.permute.xlu0 1
      %1180 = vperm.xlu0 %1179, %v998
      %v1181 = vpop.permute.xlu0 %1180
      %v1183 = vadd.f32 %v1143, %v1153
      %v1184 = vadd.f32 %v1144, %v1157
      %v1185 = vadd.f32 %v1145, %v1161
      %v1186 = vadd.f32 %v1146, %v1165
      %v1187 = vadd.f32 %v1147, %v1169
      %v1188 = vadd.f32 %v1148, %v1173
      %v1189 = vadd.f32 %v1149, %v1177
      %v1190 = vadd.f32 %v1150, %v1181
      %v1191 = vld [vmem:[%s426] sm:$0x7]
      // Predicated region
      $region61: #{bitwise_tasnet_forward.1} parent=55 // pred_check
        %p1192 = pneg %p465
      $region62: #{bitwise_tasnet_forward.1} parent=55 // pred_check_branch
        %1194 = sbr.rel (%p1192) target = $region64
      $region63: #{bitwise_tasnet_forward.1} parent=55 // pred_region
        %1195 = vrot.lane.b32.xlu0 %v1183, 1
        %v1196 = vpop.permute.xlu0 %1195
        %1197 = vrot.lane.b32.xlu0 %v1184, 1
        %v1198 = vpop.permute.xlu0 %1197
        %1199 = vrot.lane.b32.xlu0 %v1185, 1
        %v1200 = vpop.permute.xlu0 %1199
        %1201 = vrot.lane.b32.xlu0 %v1186, 1
        %v1202 = vpop.permute.xlu0 %1201
        %1203 = vrot.lane.b32.xlu0 %v1187, 1
        %v1204 = vpop.permute.xlu0 %1203
        %1205 = vrot.lane.b32.xlu0 %v1188, 1
        %v1206 = vpop.permute.xlu0 %1205
        %1207 = vrot.lane.b32.xlu0 %v1189, 1
        %v1208 = vpop.permute.xlu0 %1207
        %1209 = vrot.lane.b32.xlu0 %v1190, 1
        %v1210 = vpop.permute.xlu0 %1209
        %v1211 = vlaneseq
        %v1212 = vshrl.u32 %v1211, 7
        %v1213 = vsub.s32 0, %v1212
        %v1214 = vrot.slane %v1191, %v1213
        %v1215 = vmul.f32 %v1196, %v1214
        %v1216 = vmul.f32 %v1198, %v1214
        %v1217 = vmul.f32 %v1200, %v1214
        %v1218 = vmul.f32 %v1202, %v1214
        %v1219 = vmul.f32 %v1204, %v1214
        %v1220 = vmul.f32 %v1206, %v1214
        %v1221 = vmul.f32 %v1208, %v1214
        %v1222 = vmul.f32 %v1210, %v1214
        %1223 = vset.pattern.permute.xlu0 4
        %1224 = vperm.xlu0 %1223, %v991
        %v1225 = vpop.permute.xlu0 %1224
        %1227 = vset.pattern.permute.xlu0 4
        %1228 = vperm.xlu0 %1227, %v992
        %v1229 = vpop.permute.xlu0 %1228
        %1231 = vset.pattern.permute.xlu0 4
        %1232 = vperm.xlu0 %1231, %v993
        %v1233 = vpop.permute.xlu0 %1232
        %1235 = vset.pattern.permute.xlu0 4
        %1236 = vperm.xlu0 %1235, %v994
        %v1237 = vpop.permute.xlu0 %1236
        %1239 = vset.pattern.permute.xlu0 4
        %1240 = vperm.xlu0 %1239, %v995
        %v1241 = vpop.permute.xlu0 %1240
        %1243 = vset.pattern.permute.xlu0 4
        %1244 = vperm.xlu0 %1243, %v996
        %v1245 = vpop.permute.xlu0 %1244
        %1247 = vset.pattern.permute.xlu0 4
        %1248 = vperm.xlu0 %1247, %v997
        %v1249 = vpop.permute.xlu0 %1248
        %1251 = vset.pattern.permute.xlu0 4
        %1252 = vperm.xlu0 %1251, %v998
        %v1253 = vpop.permute.xlu0 %1252
        %v1255 = vmul.f32 %v1225, %v1215
        %v1256 = vmul.f32 %v1229, %v1216
        %v1257 = vmul.f32 %v1233, %v1217
        %v1258 = vmul.f32 %v1237, %v1218
        %v1259 = vmul.f32 %v1241, %v1219
        %v1260 = vmul.f32 %v1245, %v1220
        %v1261 = vmul.f32 %v1249, %v1221
        %v1262 = vmul.f32 %v1253, %v1222
        %1263 = vset.pattern.permute.xlu0 5
        %1264 = vperm.xlu0 %1263, %v991
        %v1265 = vpop.permute.xlu0 %1264
        %1267 = vset.pattern.permute.xlu0 5
        %1268 = vperm.xlu0 %1267, %v992
        %v1269 = vpop.permute.xlu0 %1268
        %1271 = vset.pattern.permute.xlu0 5
        %1272 = vperm.xlu0 %1271, %v993
        %v1273 = vpop.permute.xlu0 %1272
        %1275 = vset.pattern.permute.xlu0 5
        %1276 = vperm.xlu0 %1275, %v994
        %v1277 = vpop.permute.xlu0 %1276
        %1279 = vset.pattern.permute.xlu0 5
        %1280 = vperm.xlu0 %1279, %v995
        %v1281 = vpop.permute.xlu0 %1280
        %1283 = vset.pattern.permute.xlu0 5
        %1284 = vperm.xlu0 %1283, %v996
        %v1285 = vpop.permute.xlu0 %1284
        %1287 = vset.pattern.permute.xlu0 5
        %1288 = vperm.xlu0 %1287, %v997
        %v1289 = vpop.permute.xlu0 %1288
        %1291 = vset.pattern.permute.xlu0 5
        %1292 = vperm.xlu0 %1291, %v998
        %v1293 = vpop.permute.xlu0 %1292
        %v1295 = vmul.f32 %v1265, %v1183
        %v1296 = vmul.f32 %v1269, %v1184
        %v1297 = vmul.f32 %v1273, %v1185
        %v1298 = vmul.f32 %v1277, %v1186
        %v1299 = vmul.f32 %v1281, %v1187
        %v1300 = vmul.f32 %v1285, %v1188
        %v1301 = vmul.f32 %v1289, %v1189
        %v1302 = vmul.f32 %v1293, %v1190
        %v1303 = vadd.f32 %v1255, %v1295
        %v1304 = vadd.f32 %v1256, %v1296
        %v1305 = vadd.f32 %v1257, %v1297
        %v1306 = vadd.f32 %v1258, %v1298
        %v1307 = vadd.f32 %v1259, %v1299
        %v1308 = vadd.f32 %v1260, %v1300
        %v1309 = vadd.f32 %v1261, %v1301
        %v1310 = vadd.f32 %v1262, %v1302
        %1311 = vrot.lane.b32.xlu0 %v1183, 127
        %v1312 = vpop.permute.xlu0 %1311
        %1313 = vrot.lane.b32.xlu0 %v1184, 127
        %v1314 = vpop.permute.xlu0 %1313
        %1315 = vrot.lane.b32.xlu0 %v1185, 127
        %v1316 = vpop.permute.xlu0 %1315
        %1317 = vrot.lane.b32.xlu0 %v1186, 127
        %v1318 = vpop.permute.xlu0 %1317
        %1319 = vrot.lane.b32.xlu0 %v1187, 127
        %v1320 = vpop.permute.xlu0 %1319
        %1321 = vrot.lane.b32.xlu0 %v1188, 127
        %v1322 = vpop.permute.xlu0 %1321
        %1323 = vrot.lane.b32.xlu0 %v1189, 127
        %v1324 = vpop.permute.xlu0 %1323
        %1325 = vrot.lane.b32.xlu0 %v1190, 127
        %v1326 = vpop.permute.xlu0 %1325
        %v1327 = vlaneseq
        %v1328 = vshrl.u32 %v1327, 7
        %v1329 = vsub.s32 2, %v1328
        %v1330 = vrot.slane %v1191, %v1329
        %v1331 = vmul.f32 %v1312, %v1330
        %v1332 = vmul.f32 %v1314, %v1330
        %v1333 = vmul.f32 %v1316, %v1330
        %v1334 = vmul.f32 %v1318, %v1330
        %v1335 = vmul.f32 %v1320, %v1330
        %v1336 = vmul.f32 %v1322, %v1330
        %v1337 = vmul.f32 %v1324, %v1330
        %v1338 = vmul.f32 %v1326, %v1330
        %1339 = vset.pattern.permute.xlu0 6
        %1340 = vperm.xlu0 %1339, %v991
        %v1341 = vpop.permute.xlu0 %1340
        %1343 = vset.pattern.permute.xlu0 6
        %1344 = vperm.xlu0 %1343, %v992
        %v1345 = vpop.permute.xlu0 %1344
        %1347 = vset.pattern.permute.xlu0 6
        %1348 = vperm.xlu0 %1347, %v993
        %v1349 = vpop.permute.xlu0 %1348
        %1351 = vset.pattern.permute.xlu0 6
        %1352 = vperm.xlu0 %1351, %v994
        %v1353 = vpop.permute.xlu0 %1352
        %1355 = vset.pattern.permute.xlu0 6
        %1356 = vperm.xlu0 %1355, %v995
        %v1357 = vpop.permute.xlu0 %1356
        %1359 = vset.pattern.permute.xlu0 6
        %1360 = vperm.xlu0 %1359, %v996
        %v1361 = vpop.permute.xlu0 %1360
        %1363 = vset.pattern.permute.xlu0 6
        %1364 = vperm.xlu0 %1363, %v997
        %v1365 = vpop.permute.xlu0 %1364
        %1367 = vset.pattern.permute.xlu0 6
        %1368 = vperm.xlu0 %1367, %v998
        %v1369 = vpop.permute.xlu0 %1368
        %v1371 = vmul.f32 %v1341, %v1331
        %v1372 = vmul.f32 %v1345, %v1332
        %v1373 = vmul.f32 %v1349, %v1333
        %v1374 = vmul.f32 %v1353, %v1334
        %v1375 = vmul.f32 %v1357, %v1335
        %v1376 = vmul.f32 %v1361, %v1336
        %v1377 = vmul.f32 %v1365, %v1337
        %v1378 = vmul.f32 %v1369, %v1338
        %v1379 = vadd.f32 %v1303, %v1371
        %v1380 = vadd.f32 %v1304, %v1372
        %v1381 = vadd.f32 %v1305, %v1373
        %v1382 = vadd.f32 %v1306, %v1374
        %v1383 = vadd.f32 %v1307, %v1375
        %v1384 = vadd.f32 %v1308, %v1376
        %v1385 = vadd.f32 %v1309, %v1377
        %v1386 = vadd.f32 %v1310, %v1378
        %1387 = vst [vmem:[#allocation4] sm:$0xff] %v1379
        %1388 = vst [vmem:[#allocation4 + $0x8] sm:$0xff] %v1380
        %1389 = vst [vmem:[#allocation4 + $0x10] sm:$0xff] %v1381
        %1390 = vst [vmem:[#allocation4 + $0x18] sm:$0xff] %v1382
        %1391 = vst [vmem:[#allocation4 + $0x20] sm:$0xff] %v1383
        %1392 = vst [vmem:[#allocation4 + $0x28] sm:$0xff] %v1384
        %1393 = vst [vmem:[#allocation4 + $0x30] sm:$0xff] %v1385
        %1394 = vst [vmem:[#allocation4 + $0x38] sm:$0xff] %v1386
      $region64: #{bitwise_tasnet_forward.1} parent=55 // pred_fallthru
        _
      // Predicated region
      $region65: #{bitwise_tasnet_forward.1} parent=55 // pred_check
        %p1395 = pneg %p469
      $region66: #{bitwise_tasnet_forward.1} parent=55 // pred_check_branch
        %1397 = sbr.rel (%p1395) target = $region68
      $region67: #{bitwise_tasnet_forward.1} parent=55 // pred_region
        %1398 = vrot.lane.b32.xlu0 %v1183, 2
        %v1399 = vpop.permute.xlu0 %1398
        %1400 = vrot.lane.b32.xlu0 %v1184, 2
        %v1401 = vpop.permute.xlu0 %1400
        %1402 = vrot.lane.b32.xlu0 %v1185, 2
        %v1403 = vpop.permute.xlu0 %1402
        %1404 = vrot.lane.b32.xlu0 %v1186, 2
        %v1405 = vpop.permute.xlu0 %1404
        %1406 = vrot.lane.b32.xlu0 %v1187, 2
        %v1407 = vpop.permute.xlu0 %1406
        %1408 = vrot.lane.b32.xlu0 %v1188, 2
        %v1409 = vpop.permute.xlu0 %1408
        %1410 = vrot.lane.b32.xlu0 %v1189, 2
        %v1411 = vpop.permute.xlu0 %1410
        %1412 = vrot.lane.b32.xlu0 %v1190, 2
        %v1413 = vpop.permute.xlu0 %1412
        %v1414 = vlaneseq
        %v1415 = vshrl.u32 %v1414, 7
        %v1416 = vsub.s32 0, %v1415
        %v1417 = vrot.slane %v1191, %v1416
        %v1418 = vmul.f32 %v1399, %v1417
        %v1419 = vmul.f32 %v1401, %v1417
        %v1420 = vmul.f32 %v1403, %v1417
        %v1421 = vmul.f32 %v1405, %v1417
        %v1422 = vmul.f32 %v1407, %v1417
        %v1423 = vmul.f32 %v1409, %v1417
        %v1424 = vmul.f32 %v1411, %v1417
        %v1425 = vmul.f32 %v1413, %v1417
        %1426 = vset.pattern.permute.xlu0 4
        %1427 = vperm.xlu0 %1426, %v991
        %v1428 = vpop.permute.xlu0 %1427
        %1430 = vset.pattern.permute.xlu0 4
        %1431 = vperm.xlu0 %1430, %v992
        %v1432 = vpop.permute.xlu0 %1431
        %1434 = vset.pattern.permute.xlu0 4
        %1435 = vperm.xlu0 %1434, %v993
        %v1436 = vpop.permute.xlu0 %1435
        %1438 = vset.pattern.permute.xlu0 4
        %1439 = vperm.xlu0 %1438, %v994
        %v1440 = vpop.permute.xlu0 %1439
        %1442 = vset.pattern.permute.xlu0 4
        %1443 = vperm.xlu0 %1442, %v995
        %v1444 = vpop.permute.xlu0 %1443
        %1446 = vset.pattern.permute.xlu0 4
        %1447 = vperm.xlu0 %1446, %v996
        %v1448 = vpop.permute.xlu0 %1447
        %1450 = vset.pattern.permute.xlu0 4
        %1451 = vperm.xlu0 %1450, %v997
        %v1452 = vpop.permute.xlu0 %1451
        %1454 = vset.pattern.permute.xlu0 4
        %1455 = vperm.xlu0 %1454, %v998
        %v1456 = vpop.permute.xlu0 %1455
        %v1458 = vmul.f32 %v1428, %v1418
        %v1459 = vmul.f32 %v1432, %v1419
        %v1460 = vmul.f32 %v1436, %v1420
        %v1461 = vmul.f32 %v1440, %v1421
        %v1462 = vmul.f32 %v1444, %v1422
        %v1463 = vmul.f32 %v1448, %v1423
        %v1464 = vmul.f32 %v1452, %v1424
        %v1465 = vmul.f32 %v1456, %v1425
        %1466 = vset.pattern.permute.xlu0 5
        %1467 = vperm.xlu0 %1466, %v991
        %v1468 = vpop.permute.xlu0 %1467
        %1470 = vset.pattern.permute.xlu0 5
        %1471 = vperm.xlu0 %1470, %v992
        %v1472 = vpop.permute.xlu0 %1471
        %1474 = vset.pattern.permute.xlu0 5
        %1475 = vperm.xlu0 %1474, %v993
        %v1476 = vpop.permute.xlu0 %1475
        %1478 = vset.pattern.permute.xlu0 5
        %1479 = vperm.xlu0 %1478, %v994
        %v1480 = vpop.permute.xlu0 %1479
        %1482 = vset.pattern.permute.xlu0 5
        %1483 = vperm.xlu0 %1482, %v995
        %v1484 = vpop.permute.xlu0 %1483
        %1486 = vset.pattern.permute.xlu0 5
        %1487 = vperm.xlu0 %1486, %v996
        %v1488 = vpop.permute.xlu0 %1487
        %1490 = vset.pattern.permute.xlu0 5
        %1491 = vperm.xlu0 %1490, %v997
        %v1492 = vpop.permute.xlu0 %1491
        %1494 = vset.pattern.permute.xlu0 5
        %1495 = vperm.xlu0 %1494, %v998
        %v1496 = vpop.permute.xlu0 %1495
        %v1498 = vmul.f32 %v1468, %v1183
        %v1499 = vmul.f32 %v1472, %v1184
        %v1500 = vmul.f32 %v1476, %v1185
        %v1501 = vmul.f32 %v1480, %v1186
        %v1502 = vmul.f32 %v1484, %v1187
        %v1503 = vmul.f32 %v1488, %v1188
        %v1504 = vmul.f32 %v1492, %v1189
        %v1505 = vmul.f32 %v1496, %v1190
        %v1506 = vadd.f32 %v1458, %v1498
        %v1507 = vadd.f32 %v1459, %v1499
        %v1508 = vadd.f32 %v1460, %v1500
        %v1509 = vadd.f32 %v1461, %v1501
        %v1510 = vadd.f32 %v1462, %v1502
        %v1511 = vadd.f32 %v1463, %v1503
        %v1512 = vadd.f32 %v1464, %v1504
        %v1513 = vadd.f32 %v1465, %v1505
        %1514 = vrot.lane.b32.xlu0 %v1183, 126
        %v1515 = vpop.permute.xlu0 %1514
        %1516 = vrot.lane.b32.xlu0 %v1184, 126
        %v1517 = vpop.permute.xlu0 %1516
        %1518 = vrot.lane.b32.xlu0 %v1185, 126
        %v1519 = vpop.permute.xlu0 %1518
        %1520 = vrot.lane.b32.xlu0 %v1186, 126
        %v1521 = vpop.permute.xlu0 %1520
        %1522 = vrot.lane.b32.xlu0 %v1187, 126
        %v1523 = vpop.permute.xlu0 %1522
        %1524 = vrot.lane.b32.xlu0 %v1188, 126
        %v1525 = vpop.permute.xlu0 %1524
        %1526 = vrot.lane.b32.xlu0 %v1189, 126
        %v1527 = vpop.permute.xlu0 %1526
        %1528 = vrot.lane.b32.xlu0 %v1190, 126
        %v1529 = vpop.permute.xlu0 %1528
        %v1530 = vlaneseq
        %v1531 = vshrl.u32 %v1530, 7
        %v1532 = vsub.s32 2, %v1531
        %v1533 = vrot.slane %v1191, %v1532
        %v1534 = vmul.f32 %v1515, %v1533
        %v1535 = vmul.f32 %v1517, %v1533
        %v1536 = vmul.f32 %v1519, %v1533
        %v1537 = vmul.f32 %v1521, %v1533
        %v1538 = vmul.f32 %v1523, %v1533
        %v1539 = vmul.f32 %v1525, %v1533
        %v1540 = vmul.f32 %v1527, %v1533
        %v1541 = vmul.f32 %v1529, %v1533
        %1542 = vset.pattern.permute.xlu0 6
        %1543 = vperm.xlu0 %1542, %v991
        %v1544 = vpop.permute.xlu0 %1543
        %1546 = vset.pattern.permute.xlu0 6
        %1547 = vperm.xlu0 %1546, %v992
        %v1548 = vpop.permute.xlu0 %1547
        %1550 = vset.pattern.permute.xlu0 6
        %1551 = vperm.xlu0 %1550, %v993
        %v1552 = vpop.permute.xlu0 %1551
        %1554 = vset.pattern.permute.xlu0 6
        %1555 = vperm.xlu0 %1554, %v994
        %v1556 = vpop.permute.xlu0 %1555
        %1558 = vset.pattern.permute.xlu0 6
        %1559 = vperm.xlu0 %1558, %v995
        %v1560 = vpop.permute.xlu0 %1559
        %1562 = vset.pattern.permute.xlu0 6
        %1563 = vperm.xlu0 %1562, %v996
        %v1564 = vpop.permute.xlu0 %1563
        %1566 = vset.pattern.permute.xlu0 6
        %1567 = vperm.xlu0 %1566, %v997
        %v1568 = vpop.permute.xlu0 %1567
        %1570 = vset.pattern.permute.xlu0 6
        %1571 = vperm.xlu0 %1570, %v998
        %v1572 = vpop.permute.xlu0 %1571
        %v1574 = vmul.f32 %v1544, %v1534
        %v1575 = vmul.f32 %v1548, %v1535
        %v1576 = vmul.f32 %v1552, %v1536
        %v1577 = vmul.f32 %v1556, %v1537
        %v1578 = vmul.f32 %v1560, %v1538
        %v1579 = vmul.f32 %v1564, %v1539
        %v1580 = vmul.f32 %v1568, %v1540
        %v1581 = vmul.f32 %v1572, %v1541
        %v1582 = vadd.f32 %v1506, %v1574
        %v1583 = vadd.f32 %v1507, %v1575
        %v1584 = vadd.f32 %v1508, %v1576
        %v1585 = vadd.f32 %v1509, %v1577
        %v1586 = vadd.f32 %v1510, %v1578
        %v1587 = vadd.f32 %v1511, %v1579
        %v1588 = vadd.f32 %v1512, %v1580
        %v1589 = vadd.f32 %v1513, %v1581
        %1590 = vst [vmem:[#allocation4] sm:$0xff] %v1582
        %1591 = vst [vmem:[#allocation4 + $0x8] sm:$0xff] %v1583
        %1592 = vst [vmem:[#allocation4 + $0x10] sm:$0xff] %v1584
        %1593 = vst [vmem:[#allocation4 + $0x18] sm:$0xff] %v1585
        %1594 = vst [vmem:[#allocation4 + $0x20] sm:$0xff] %v1586
        %1595 = vst [vmem:[#allocation4 + $0x28] sm:$0xff] %v1587
        %1596 = vst [vmem:[#allocation4 + $0x30] sm:$0xff] %v1588
        %1597 = vst [vmem:[#allocation4 + $0x38] sm:$0xff] %v1589
      $region68: #{bitwise_tasnet_forward.1} parent=55 // pred_fallthru
        _
      %v1598 = vld [vmem:[#allocation4] sm:$0xff]
      %v1599 = vld [vmem:[#allocation4 + $0x8] sm:$0xff]
      %v1600 = vld [vmem:[#allocation4 + $0x10] sm:$0xff]
      %v1601 = vld [vmem:[#allocation4 + $0x18] sm:$0xff]
      %v1602 = vld [vmem:[#allocation4 + $0x20] sm:$0xff]
      %v1603 = vld [vmem:[#allocation4 + $0x28] sm:$0xff]
      %v1604 = vld [vmem:[#allocation4 + $0x30] sm:$0xff]
      %v1605 = vld [vmem:[#allocation4 + $0x38] sm:$0xff]
      %v1606 = vld [vmem:[%s462] sm:$0xff]
      %v1607 = vld [vmem:[%s462 + $0x8] sm:$0xff]
      %v1608 = vld [vmem:[%s462 + $0x10] sm:$0xff]
      %v1609 = vld [vmem:[%s462 + $0x18] sm:$0xff]
      %v1610 = vld [vmem:[%s462 + $0x20] sm:$0xff]
      %v1611 = vld [vmem:[%s462 + $0x28] sm:$0xff]
      %v1612 = vld [vmem:[%s462 + $0x30] sm:$0xff]
      %v1613 = vld [vmem:[%s462 + $0x38] sm:$0xff]
      %1614 = vadd.xlane.f32.xlu0 %v1598
      %v1615 = vpop.xlane.xlu0 %1614
      %1616 = vadd.xlane.f32.xlu0 %v1599
      %v1617 = vpop.xlane.xlu0 %1616
      %1618 = vadd.xlane.f32.xlu0 %v1600
      %v1619 = vpop.xlane.xlu0 %1618
      %1620 = vadd.xlane.f32.xlu0 %v1601
      %v1621 = vpop.xlane.xlu0 %1620
      %1622 = vadd.xlane.f32.xlu0 %v1602
      %v1623 = vpop.xlane.xlu0 %1622
      %1624 = vadd.xlane.f32.xlu0 %v1603
      %v1625 = vpop.xlane.xlu0 %1624
      %1626 = vadd.xlane.f32.xlu0 %v1604
      %v1627 = vpop.xlane.xlu0 %1626
      %1628 = vadd.xlane.f32.xlu0 %v1605
      %v1629 = vpop.xlane.xlu0 %1628
      %v1630 = vmul.f32 %v1615, 0.0078125
      %v1631 = vmul.f32 %v1617, 0.0078125
      %v1632 = vmul.f32 %v1619, 0.0078125
      %v1633 = vmul.f32 %v1621, 0.0078125
      %v1634 = vmul.f32 %v1623, 0.0078125
      %v1635 = vmul.f32 %v1625, 0.0078125
      %v1636 = vmul.f32 %v1627, 0.0078125
      %v1637 = vmul.f32 %v1629, 0.0078125
      %v1638 = vmul.f32 %v1598, %v1598
      %v1639 = vmul.f32 %v1599, %v1599
      %v1640 = vmul.f32 %v1600, %v1600
      %v1641 = vmul.f32 %v1601, %v1601
      %v1642 = vmul.f32 %v1602, %v1602
      %v1643 = vmul.f32 %v1603, %v1603
      %v1644 = vmul.f32 %v1604, %v1604
      %v1645 = vmul.f32 %v1605, %v1605
      %1646 = vadd.xlane.f32.xlu0 %v1638
      %v1647 = vpop.xlane.xlu0 %1646
      %1648 = vadd.xlane.f32.xlu0 %v1639
      %v1649 = vpop.xlane.xlu0 %1648
      %1650 = vadd.xlane.f32.xlu0 %v1640
      %v1651 = vpop.xlane.xlu0 %1650
      %1652 = vadd.xlane.f32.xlu0 %v1641
      %v1653 = vpop.xlane.xlu0 %1652
      %1654 = vadd.xlane.f32.xlu0 %v1642
      %v1655 = vpop.xlane.xlu0 %1654
      %1656 = vadd.xlane.f32.xlu0 %v1643
      %v1657 = vpop.xlane.xlu0 %1656
      %1658 = vadd.xlane.f32.xlu0 %v1644
      %v1659 = vpop.xlane.xlu0 %1658
      %1660 = vadd.xlane.f32.xlu0 %v1645
      %v1661 = vpop.xlane.xlu0 %1660
      %v1662 = vmul.f32 %v1647, 0.0078125
      %v1663 = vmul.f32 %v1649, 0.0078125
      %v1664 = vmul.f32 %v1651, 0.0078125
      %v1665 = vmul.f32 %v1653, 0.0078125
      %v1666 = vmul.f32 %v1655, 0.0078125
      %v1667 = vmul.f32 %v1657, 0.0078125
      %v1668 = vmul.f32 %v1659, 0.0078125
      %v1669 = vmul.f32 %v1661, 0.0078125
      %v1670 = vmul.f32 %v1630, %v1630
      %v1671 = vmul.f32 %v1631, %v1631
      %v1672 = vmul.f32 %v1632, %v1632
      %v1673 = vmul.f32 %v1633, %v1633
      %v1674 = vmul.f32 %v1634, %v1634
      %v1675 = vmul.f32 %v1635, %v1635
      %v1676 = vmul.f32 %v1636, %v1636
      %v1677 = vmul.f32 %v1637, %v1637
      %v1678 = vsub.f32 %v1662, %v1670
      %v1679 = vsub.f32 %v1663, %v1671
      %v1680 = vsub.f32 %v1664, %v1672
      %v1681 = vsub.f32 %v1665, %v1673
      %v1682 = vsub.f32 %v1666, %v1674
      %v1683 = vsub.f32 %v1667, %v1675
      %v1684 = vsub.f32 %v1668, %v1676
      %v1685 = vsub.f32 %v1669, %v1677
      %v1686 = vsub.f32 %v1598, %v1630
      %v1687 = vsub.f32 %v1599, %v1631
      %v1688 = vsub.f32 %v1600, %v1632
      %v1689 = vsub.f32 %v1601, %v1633
      %v1690 = vsub.f32 %v1602, %v1634
      %v1691 = vsub.f32 %v1603, %v1635
      %v1692 = vsub.f32 %v1604, %v1636
      %v1693 = vsub.f32 %v1605, %v1637
      %1695 = vset.pattern.permute.xlu0 2
      %1696 = vperm.xlu0 %1695, %v1606
      %v1697 = vpop.permute.xlu0 %1696
      %1700 = vset.pattern.permute.xlu0 2
      %1701 = vperm.xlu0 %1700, %v1607
      %v1702 = vpop.permute.xlu0 %1701
      %1705 = vset.pattern.permute.xlu0 2
      %1706 = vperm.xlu0 %1705, %v1608
      %v1707 = vpop.permute.xlu0 %1706
      %1710 = vset.pattern.permute.xlu0 2
      %1711 = vperm.xlu0 %1710, %v1609
      %v1712 = vpop.permute.xlu0 %1711
      %1715 = vset.pattern.permute.xlu0 2
      %1716 = vperm.xlu0 %1715, %v1610
      %v1717 = vpop.permute.xlu0 %1716
      %1720 = vset.pattern.permute.xlu0 2
      %1721 = vperm.xlu0 %1720, %v1611
      %v1722 = vpop.permute.xlu0 %1721
      %1725 = vset.pattern.permute.xlu0 2
      %1726 = vperm.xlu0 %1725, %v1612
      %v1727 = vpop.permute.xlu0 %1726
      %1730 = vset.pattern.permute.xlu0 2
      %1731 = vperm.xlu0 %1730, %v1613
      %v1732 = vpop.permute.xlu0 %1731
      %v1734 = vmul.f32 %v1697, %v1686
      %v1735 = vmul.f32 %v1702, %v1687
      %v1736 = vmul.f32 %v1707, %v1688
      %v1737 = vmul.f32 %v1712, %v1689
      %v1738 = vmul.f32 %v1717, %v1690
      %v1739 = vmul.f32 %v1722, %v1691
      %v1740 = vmul.f32 %v1727, %v1692
      %v1741 = vmul.f32 %v1732, %v1693
      %v1742 = vadd.f32 %v1678, 1e-05
      %v1743 = vadd.f32 %v1679, 1e-05
      %v1744 = vadd.f32 %v1680, 1e-05
      %v1745 = vadd.f32 %v1681, 1e-05
      %v1746 = vadd.f32 %v1682, 1e-05
      %v1747 = vadd.f32 %v1683, 1e-05
      %v1748 = vadd.f32 %v1684, 1e-05
      %v1749 = vadd.f32 %v1685, 1e-05
      %v1750 = vrsqrt.pop %v1742
      %v1751 = vrsqrt.pop %v1743
      %v1752 = vrsqrt.pop %v1744
      %v1753 = vrsqrt.pop %v1745
      %v1754 = vrsqrt.pop %v1746
      %v1755 = vrsqrt.pop %v1747
      %v1756 = vrsqrt.pop %v1748
      %v1757 = vrsqrt.pop %v1749
      %v1758 = vmul.f32 %v1734, %v1750
      %v1759 = vmul.f32 %v1735, %v1751
      %v1760 = vmul.f32 %v1736, %v1752
      %v1761 = vmul.f32 %v1737, %v1753
      %v1762 = vmul.f32 %v1738, %v1754
      %v1763 = vmul.f32 %v1739, %v1755
      %v1764 = vmul.f32 %v1740, %v1756
      %v1765 = vmul.f32 %v1741, %v1757
      %1766 = vset.pattern.permute.xlu0 3
      %1767 = vperm.xlu0 %1766, %v1606
      %v1768 = vpop.permute.xlu0 %1767
      %1770 = vset.pattern.permute.xlu0 3
      %1771 = vperm.xlu0 %1770, %v1607
      %v1772 = vpop.permute.xlu0 %1771
      %1774 = vset.pattern.permute.xlu0 3
      %1775 = vperm.xlu0 %1774, %v1608
      %v1776 = vpop.permute.xlu0 %1775
      %1778 = vset.pattern.permute.xlu0 3
      %1779 = vperm.xlu0 %1778, %v1609
      %v1780 = vpop.permute.xlu0 %1779
      %1782 = vset.pattern.permute.xlu0 3
      %1783 = vperm.xlu0 %1782, %v1610
      %v1784 = vpop.permute.xlu0 %1783
      %1786 = vset.pattern.permute.xlu0 3
      %1787 = vperm.xlu0 %1786, %v1611
      %v1788 = vpop.permute.xlu0 %1787
      %1790 = vset.pattern.permute.xlu0 3
      %1791 = vperm.xlu0 %1790, %v1612
      %v1792 = vpop.permute.xlu0 %1791
      %1794 = vset.pattern.permute.xlu0 3
      %1795 = vperm.xlu0 %1794, %v1613
      %v1796 = vpop.permute.xlu0 %1795
      %v1798 = vadd.f32 %v1758, %v1768
      %v1799 = vadd.f32 %v1759, %v1772
      %v1800 = vadd.f32 %v1760, %v1776
      %v1801 = vadd.f32 %v1761, %v1780
      %v1802 = vadd.f32 %v1762, %v1784
      %v1803 = vadd.f32 %v1763, %v1788
      %v1804 = vadd.f32 %v1764, %v1792
      %v1805 = vadd.f32 %v1765, %v1796
      %v1806 = vld [vmem:[%s444] sm:$0xf]
      %v1807 = vld [vmem:[%s444 + $0x4] sm:$0xf]
      %v1808 = vld [vmem:[%s444 + $0x8] sm:$0xf]
      %v1809 = vld [vmem:[%s444 + $0xc] sm:$0xf]
      %v1810 = vld [vmem:[%s444 + $0x10] sm:$0xf]
      %v1811 = vld [vmem:[%s444 + $0x14] sm:$0xf]
      %v1812 = vld [vmem:[%s444 + $0x18] sm:$0xf]
      %v1813 = vld [vmem:[%s444 + $0x1c] sm:$0xf]
      %v1814 = vpack.c.bf16 %v1799, %v1798
      %v1815 = vpack.c.bf16 %v1801, %v1800
      %v1816 = vpack.c.bf16 %v1803, %v1802
      %v1817 = vpack.c.bf16 %v1805, %v1804
      %v1826 = vunpack.c.l.b16 %v1806
      %v1827 = vunpack.c.l.b16 %v1807
      %v1828 = vunpack.c.l.b16 %v1808
      %v1829 = vunpack.c.l.b16 %v1809
      %v1830 = vunpack.c.l.b16 %v1810
      %v1831 = vunpack.c.l.b16 %v1811
      %v1832 = vunpack.c.l.b16 %v1812
      %v1833 = vunpack.c.l.b16 %v1813
      %v1834 = vpack.c.b16 %v1827, %v1826
      %v1835 = vpack.c.b16 %v1829, %v1828
      %v1836 = vpack.c.b16 %v1831, %v1830
      %v1837 = vpack.c.b16 %v1833, %v1832
      %v1839 = vsel %vm913, %v1834, 0
      %v1842 = vsel %vm913, %v1835, 0
      %v1845 = vsel %vm913, %v1836, 0
      %v1848 = vsel %vm913, %v1837, 0
      %1850 = vmatprep.subr.bf16.mxu0 0
      %1851 = vmatpush1.bf16.msra.mxu0 %v1814
      %1852 = vmatprep.subr.bf16.mxu0 0
      %1853 = vmatpush1.bf16.msra.mxu0 %v1815
      %1854 = vmatprep.subr.bf16.mxu0 0
      %1855 = vmatpush1.bf16.msra.mxu0 %v1816
      %1856 = vmatprep.subr.bf16.mxu0 0
      %1857 = vmatpush1.bf16.msra.mxu0 %v1817
      %1858 = vmatprep.subr.bf16.mxu0 0
      %1859 = vmatpush1.bf16.msra.mxu0 0
      %1860 = vmatprep.subr.bf16.mxu0 0
      %1861 = vmatpush1.bf16.msra.mxu0 0
      %1862 = vmatprep.subr.bf16.mxu0 0
      %1863 = vmatpush1.bf16.msra.mxu0 0
      %1864 = vmatprep.subr.bf16.mxu0 0
      %1865 = vmatpush1.bf16.msra.mxu0 0
      %1866 = vmatprep.subr.bf16.mxu0 0
      %1867 = vmatpush1.bf16.msra.mxu0 0
      %1868 = vmatprep.subr.bf16.mxu0 0
      %1869 = vmatpush1.bf16.msra.mxu0 0
      %1870 = vmatprep.subr.bf16.mxu0 0
      %1871 = vmatpush1.bf16.msra.mxu0 0
      %1872 = vmatprep.subr.bf16.mxu0 0
      %1873 = vmatpush1.bf16.msra.mxu0 0
      %1874 = vmatprep.subr.bf16.mxu0 0
      %1875 = vmatpush1.bf16.msra.mxu0 0
      %1876 = vmatprep.subr.bf16.mxu0 0
      %1877 = vmatpush1.bf16.msra.mxu0 0
      %1878 = vmatprep.subr.bf16.mxu0 0
      %1879 = vmatpush1.bf16.msra.mxu0 0
      %1880 = vmatprep.subr.bf16.mxu0 0
      %1881 = vmatpush1.bf16.msra.mxu0 0
      %1882 = vmatprep.mubr.bf16.mxu0 0
      %1883 = vmatmul.mubr.bf16.gmra.mrb[0].mxu0 %v1839
      %v1884 = vpop.f32.mrb[0].mxu0
      %v1885 = vadd.f32 0.0, %v1884
      %v1886 = vpop.f32.mrb[0].mxu0
      %v1887 = vpop.f32.mrb[0].mxu0
      %v1888 = vadd.f32 0.0, %v1887
      %v1889 = vpop.f32.mrb[0].mxu0
      %1890 = vmatprep.mubr.bf16.mxu0 0
      %1891 = vmatmul.mubr.bf16.gmra.mrb[0].mxu0 %v1842
      %v1892 = vpop.f32.mrb[0].mxu0
      %v1893 = vadd.f32 0.0, %v1892
      %v1894 = vpop.f32.mrb[0].mxu0
      %v1895 = vpop.f32.mrb[0].mxu0
      %v1896 = vadd.f32 0.0, %v1895
      %v1897 = vpop.f32.mrb[0].mxu0
      %1898 = vmatprep.mubr.bf16.mxu0 0
      %1899 = vmatmul.mubr.bf16.gmra.mrb[0].mxu0 %v1845
      %v1900 = vpop.f32.mrb[0].mxu0
      %v1901 = vadd.f32 0.0, %v1900
      %v1902 = vpop.f32.mrb[0].mxu0
      %v1903 = vpop.f32.mrb[0].mxu0
      %v1904 = vadd.f32 0.0, %v1903
      %v1905 = vpop.f32.mrb[0].mxu0
      %1906 = vmatprep.mubr.bf16.mxu0 0
      %1907 = vmatmul.mubr.bf16.gmra.mrb[0].mxu0 %v1848
      %v1908 = vpop.f32.mrb[0].mxu0
      %v1909 = vadd.f32 0.0, %v1908
      %v1910 = vpop.f32.mrb[0].mxu0
      %v1911 = vpop.f32.mrb[0].mxu0
      %v1912 = vadd.f32 0.0, %v1911
      %v1913 = vpop.f32.mrb[0].mxu0
      %1914 = vdwg.mxu0
      %v1915 = vadd.f32 %v673, %v1885
      %v1916 = vadd.f32 %v674, %v1888
      %v1917 = vadd.f32 %v675, %v1893
      %v1918 = vadd.f32 %v676, %v1896
      %v1919 = vadd.f32 %v677, %v1901
      %v1920 = vadd.f32 %v678, %v1904
      %v1921 = vadd.f32 %v679, %v1909
      %v1922 = vadd.f32 %v680, %v1912
      %1923 = vst [vmem:[#allocation3] sm:$0xff] %v1915
      %1924 = vst [vmem:[#allocation3 + $0x8] sm:$0xff] %v1916
      %1925 = vst [vmem:[#allocation3 + $0x10] sm:$0xff] %v1917
      %1926 = vst [vmem:[#allocation3 + $0x18] sm:$0xff] %v1918
      %1927 = vst [vmem:[#allocation3 + $0x20] sm:$0xff] %v1919
      %1928 = vst [vmem:[#allocation3 + $0x28] sm:$0xff] %v1920
      %1929 = vst [vmem:[#allocation3 + $0x30] sm:$0xff] %v1921
      %1930 = vst [vmem:[#allocation3 + $0x38] sm:$0xff] %v1922
      // Predicated region
      $region69: #{bitwise_tasnet_forward.1} parent=55 // pred_check
        _
      $region70: #{bitwise_tasnet_forward.1} parent=55 // pred_check_branch
        %1932 = sbr.rel (%p470) target = $region72
      $region71: #{bitwise_tasnet_forward.1} parent=55 // pred_region
        %v1933 = vld [vmem:[#allocation2] sm:$0xff]
        %v1934 = vld [vmem:[#allocation2 + $0x8] sm:$0xff]
        %v1935 = vld [vmem:[#allocation2 + $0x10] sm:$0xff]
        %v1936 = vld [vmem:[#allocation2 + $0x18] sm:$0xff]
        %v1937 = vld [vmem:[#allocation2 + $0x20] sm:$0xff]
        %v1938 = vld [vmem:[#allocation2 + $0x28] sm:$0xff]
        %v1939 = vld [vmem:[#allocation2 + $0x30] sm:$0xff]
        %v1940 = vld [vmem:[#allocation2 + $0x38] sm:$0xff]
        %v1941 = vld [vmem:[#allocation3] sm:$0xff]
        %v1942 = vld [vmem:[#allocation3 + $0x8] sm:$0xff]
        %v1943 = vld [vmem:[#allocation3 + $0x10] sm:$0xff]
        %v1944 = vld [vmem:[#allocation3 + $0x18] sm:$0xff]
        %v1945 = vld [vmem:[#allocation3 + $0x20] sm:$0xff]
        %v1946 = vld [vmem:[#allocation3 + $0x28] sm:$0xff]
        %v1947 = vld [vmem:[#allocation3 + $0x30] sm:$0xff]
        %v1948 = vld [vmem:[#allocation3 + $0x38] sm:$0xff]
        %v1949 = vld [vmem:[%s3] sm:$0xff]
        %v1950 = vld [vmem:[%s3 + $0x8] sm:$0xff]
        %v1951 = vld [vmem:[%s3 + $0x10] sm:$0xff]
        %v1952 = vld [vmem:[%s3 + $0x18] sm:$0xff]
        %v1953 = vld [vmem:[%s3 + $0x20] sm:$0xff]
        %v1954 = vld [vmem:[%s3 + $0x28] sm:$0xff]
        %v1955 = vld [vmem:[%s3 + $0x30] sm:$0xff]
        %v1956 = vld [vmem:[%s3 + $0x38] sm:$0xff]
        %1957 = vadd.xlane.f32.xlu0 %v1941
        %v1958 = vpop.xlane.xlu0 %1957
        %1959 = vadd.xlane.f32.xlu0 %v1942
        %v1960 = vpop.xlane.xlu0 %1959
        %1961 = vadd.xlane.f32.xlu0 %v1943
        %v1962 = vpop.xlane.xlu0 %1961
        %1963 = vadd.xlane.f32.xlu0 %v1944
        %v1964 = vpop.xlane.xlu0 %1963
        %1965 = vadd.xlane.f32.xlu0 %v1945
        %v1966 = vpop.xlane.xlu0 %1965
        %1967 = vadd.xlane.f32.xlu0 %v1946
        %v1968 = vpop.xlane.xlu0 %1967
        %1969 = vadd.xlane.f32.xlu0 %v1947
        %v1970 = vpop.xlane.xlu0 %1969
        %1971 = vadd.xlane.f32.xlu0 %v1948
        %v1972 = vpop.xlane.xlu0 %1971
        %v1973 = vmul.f32 %v1958, 0.0078125
        %v1974 = vmul.f32 %v1960, 0.0078125
        %v1975 = vmul.f32 %v1962, 0.0078125
        %v1976 = vmul.f32 %v1964, 0.0078125
        %v1977 = vmul.f32 %v1966, 0.0078125
        %v1978 = vmul.f32 %v1968, 0.0078125
        %v1979 = vmul.f32 %v1970, 0.0078125
        %v1980 = vmul.f32 %v1972, 0.0078125
        %v1981 = vmul.f32 %v1941, %v1941
        %v1982 = vmul.f32 %v1942, %v1942
        %v1983 = vmul.f32 %v1943, %v1943
        %v1984 = vmul.f32 %v1944, %v1944
        %v1985 = vmul.f32 %v1945, %v1945
        %v1986 = vmul.f32 %v1946, %v1946
        %v1987 = vmul.f32 %v1947, %v1947
        %v1988 = vmul.f32 %v1948, %v1948
        %1989 = vadd.xlane.f32.xlu0 %v1981
        %v1990 = vpop.xlane.xlu0 %1989
        %1991 = vadd.xlane.f32.xlu0 %v1982
        %v1992 = vpop.xlane.xlu0 %1991
        %1993 = vadd.xlane.f32.xlu0 %v1983
        %v1994 = vpop.xlane.xlu0 %1993
        %1995 = vadd.xlane.f32.xlu0 %v1984
        %v1996 = vpop.xlane.xlu0 %1995
        %1997 = vadd.xlane.f32.xlu0 %v1985
        %v1998 = vpop.xlane.xlu0 %1997
        %1999 = vadd.xlane.f32.xlu0 %v1986
        %v2000 = vpop.xlane.xlu0 %1999
        %2001 = vadd.xlane.f32.xlu0 %v1987
        %v2002 = vpop.xlane.xlu0 %2001
        %2003 = vadd.xlane.f32.xlu0 %v1988
        %v2004 = vpop.xlane.xlu0 %2003
        %v2005 = vmul.f32 %v1990, 0.0078125
        %v2006 = vmul.f32 %v1992, 0.0078125
        %v2007 = vmul.f32 %v1994, 0.0078125
        %v2008 = vmul.f32 %v1996, 0.0078125
        %v2009 = vmul.f32 %v1998, 0.0078125
        %v2010 = vmul.f32 %v2000, 0.0078125
        %v2011 = vmul.f32 %v2002, 0.0078125
        %v2012 = vmul.f32 %v2004, 0.0078125
        %v2013 = vmul.f32 %v1973, %v1973
        %v2014 = vmul.f32 %v1974, %v1974
        %v2015 = vmul.f32 %v1975, %v1975
        %v2016 = vmul.f32 %v1976, %v1976
        %v2017 = vmul.f32 %v1977, %v1977
        %v2018 = vmul.f32 %v1978, %v1978
        %v2019 = vmul.f32 %v1979, %v1979
        %v2020 = vmul.f32 %v1980, %v1980
        %v2021 = vsub.f32 %v2005, %v2013
        %v2022 = vsub.f32 %v2006, %v2014
        %v2023 = vsub.f32 %v2007, %v2015
        %v2024 = vsub.f32 %v2008, %v2016
        %v2025 = vsub.f32 %v2009, %v2017
        %v2026 = vsub.f32 %v2010, %v2018
        %v2027 = vsub.f32 %v2011, %v2019
        %v2028 = vsub.f32 %v2012, %v2020
        %v2029 = vsub.f32 %v1941, %v1973
        %v2030 = vsub.f32 %v1942, %v1974
        %v2031 = vsub.f32 %v1943, %v1975
        %v2032 = vsub.f32 %v1944, %v1976
        %v2033 = vsub.f32 %v1945, %v1977
        %v2034 = vsub.f32 %v1946, %v1978
        %v2035 = vsub.f32 %v1947, %v1979
        %v2036 = vsub.f32 %v1948, %v1980
        %2038 = vset.pattern.permute.xlu0 0
        %2039 = vperm.xlu0 %2038, %v1949
        %v2040 = vpop.permute.xlu0 %2039
        %2043 = vset.pattern.permute.xlu0 0
        %2044 = vperm.xlu0 %2043, %v1950
        %v2045 = vpop.permute.xlu0 %2044
        %2048 = vset.pattern.permute.xlu0 0
        %2049 = vperm.xlu0 %2048, %v1951
        %v2050 = vpop.permute.xlu0 %2049
        %2053 = vset.pattern.permute.xlu0 0
        %2054 = vperm.xlu0 %2053, %v1952
        %v2055 = vpop.permute.xlu0 %2054
        %2058 = vset.pattern.permute.xlu0 0
        %2059 = vperm.xlu0 %2058, %v1953
        %v2060 = vpop.permute.xlu0 %2059
        %2063 = vset.pattern.permute.xlu0 0
        %2064 = vperm.xlu0 %2063, %v1954
        %v2065 = vpop.permute.xlu0 %2064
        %2068 = vset.pattern.permute.xlu0 0
        %2069 = vperm.xlu0 %2068, %v1955
        %v2070 = vpop.permute.xlu0 %2069
        %2073 = vset.pattern.permute.xlu0 0
        %2074 = vperm.xlu0 %2073, %v1956
        %v2075 = vpop.permute.xlu0 %2074
        %v2077 = vmul.f32 %v2040, %v2029
        %v2078 = vmul.f32 %v2045, %v2030
        %v2079 = vmul.f32 %v2050, %v2031
        %v2080 = vmul.f32 %v2055, %v2032
        %v2081 = vmul.f32 %v2060, %v2033
        %v2082 = vmul.f32 %v2065, %v2034
        %v2083 = vmul.f32 %v2070, %v2035
        %v2084 = vmul.f32 %v2075, %v2036
        %v2085 = vadd.f32 %v2021, 1e-05
        %v2086 = vadd.f32 %v2022, 1e-05
        %v2087 = vadd.f32 %v2023, 1e-05
        %v2088 = vadd.f32 %v2024, 1e-05
        %v2089 = vadd.f32 %v2025, 1e-05
        %v2090 = vadd.f32 %v2026, 1e-05
        %v2091 = vadd.f32 %v2027, 1e-05
        %v2092 = vadd.f32 %v2028, 1e-05
        %v2093 = vrsqrt.pop %v2085
        %v2094 = vrsqrt.pop %v2086
        %v2095 = vrsqrt.pop %v2087
        %v2096 = vrsqrt.pop %v2088
        %v2097 = vrsqrt.pop %v2089
        %v2098 = vrsqrt.pop %v2090
        %v2099 = vrsqrt.pop %v2091
        %v2100 = vrsqrt.pop %v2092
        %v2101 = vmul.f32 %v2077, %v2093
        %v2102 = vmul.f32 %v2078, %v2094
        %v2103 = vmul.f32 %v2079, %v2095
        %v2104 = vmul.f32 %v2080, %v2096
        %v2105 = vmul.f32 %v2081, %v2097
        %v2106 = vmul.f32 %v2082, %v2098
        %v2107 = vmul.f32 %v2083, %v2099
        %v2108 = vmul.f32 %v2084, %v2100
        %2109 = vset.pattern.permute.xlu0 1
        %2110 = vperm.xlu0 %2109, %v1949
        %v2111 = vpop.permute.xlu0 %2110
        %2113 = vset.pattern.permute.xlu0 1
        %2114 = vperm.xlu0 %2113, %v1950
        %v2115 = vpop.permute.xlu0 %2114
        %2117 = vset.pattern.permute.xlu0 1
        %2118 = vperm.xlu0 %2117, %v1951
        %v2119 = vpop.permute.xlu0 %2118
        %2121 = vset.pattern.permute.xlu0 1
        %2122 = vperm.xlu0 %2121, %v1952
        %v2123 = vpop.permute.xlu0 %2122
        %2125 = vset.pattern.permute.xlu0 1
        %2126 = vperm.xlu0 %2125, %v1953
        %v2127 = vpop.permute.xlu0 %2126
        %2129 = vset.pattern.permute.xlu0 1
        %2130 = vperm.xlu0 %2129, %v1954
        %v2131 = vpop.permute.xlu0 %2130
        %2133 = vset.pattern.permute.xlu0 1
        %2134 = vperm.xlu0 %2133, %v1955
        %v2135 = vpop.permute.xlu0 %2134
        %2137 = vset.pattern.permute.xlu0 1
        %2138 = vperm.xlu0 %2137, %v1956
        %v2139 = vpop.permute.xlu0 %2138
        %v2141 = vadd.f32 %v2101, %v2111
        %v2142 = vadd.f32 %v2102, %v2115
        %v2143 = vadd.f32 %v2103, %v2119
        %v2144 = vadd.f32 %v2104, %v2123
        %v2145 = vadd.f32 %v2105, %v2127
        %v2146 = vadd.f32 %v2106, %v2131
        %v2147 = vadd.f32 %v2107, %v2135
        %v2148 = vadd.f32 %v2108, %v2139
        %v2149 = vxor.u32 %v2141, 2147483648
        %v2150 = vxor.u32 %v2142, 2147483648
        %v2151 = vxor.u32 %v2143, 2147483648
        %v2152 = vxor.u32 %v2144, 2147483648
        %v2153 = vxor.u32 %v2145, 2147483648
        %v2154 = vxor.u32 %v2146, 2147483648
        %v2155 = vxor.u32 %v2147, 2147483648
        %v2156 = vxor.u32 %v2148, 2147483648
        %v2157 = vmul.f32 %v2149, 1.442695
        %v2158 = vpow.pop %v2157
        %v2159 = vmul.f32 %v2150, 1.442695
        %v2160 = vpow.pop %v2159
        %v2161 = vmul.f32 %v2151, 1.442695
        %v2162 = vpow.pop %v2161
        %v2163 = vmul.f32 %v2152, 1.442695
        %v2164 = vpow.pop %v2163
        %v2165 = vmul.f32 %v2153, 1.442695
        %v2166 = vpow.pop %v2165
        %v2167 = vmul.f32 %v2154, 1.442695
        %v2168 = vpow.pop %v2167
        %v2169 = vmul.f32 %v2155, 1.442695
        %v2170 = vpow.pop %v2169
        %v2171 = vmul.f32 %v2156, 1.442695
        %v2172 = vpow.pop %v2171
        %v2173 = vadd.f32 %v2158, 1.0
        %v2174 = vadd.f32 %v2160, 1.0
        %v2175 = vadd.f32 %v2162, 1.0
        %v2176 = vadd.f32 %v2164, 1.0
        %v2177 = vadd.f32 %v2166, 1.0
        %v2178 = vadd.f32 %v2168, 1.0
        %v2179 = vadd.f32 %v2170, 1.0
        %v2180 = vadd.f32 %v2172, 1.0
        %v2181 = vrcp.pop %v2173
        %v2182 = vmul.f32 1.0, %v2181
        %v2183 = vrcp.pop %v2174
        %v2184 = vmul.f32 1.0, %v2183
        %v2185 = vrcp.pop %v2175
        %v2186 = vmul.f32 1.0, %v2185
        %v2187 = vrcp.pop %v2176
        %v2188 = vmul.f32 1.0, %v2187
        %v2189 = vrcp.pop %v2177
        %v2190 = vmul.f32 1.0, %v2189
        %v2191 = vrcp.pop %v2178
        %v2192 = vmul.f32 1.0, %v2191
        %v2193 = vrcp.pop %v2179
        %v2194 = vmul.f32 1.0, %v2193
        %v2195 = vrcp.pop %v2180
        %v2196 = vmul.f32 1.0, %v2195
        %v2197 = vmul.f32 %v1933, %v2182
        %v2198 = vmul.f32 %v1934, %v2184
        %v2199 = vmul.f32 %v1935, %v2186
        %v2200 = vmul.f32 %v1936, %v2188
        %v2201 = vmul.f32 %v1937, %v2190
        %v2202 = vmul.f32 %v1938, %v2192
        %v2203 = vmul.f32 %v1939, %v2194
        %v2204 = vmul.f32 %v1940, %v2196
        %v2205 = vld [vmem:[%s2] sm:$0xf]
        %v2206 = vpack.c.bf16 %v2198, %v2197
        %v2207 = vpack.c.bf16 %v2200, %v2199
        %v2208 = vpack.c.bf16 %v2202, %v2201
        %v2209 = vpack.c.bf16 %v2204, %v2203
        %v2211 = vsel %vm913, %v2205, 0
        %2213 = vmatprep.subr.bf16.mxu0 0
        %2214 = vmatpush1.bf16.msra.mxu0 %v2206
        %2215 = vmatprep.subr.bf16.mxu0 0
        %2216 = vmatpush1.bf16.msra.mxu0 %v2207
        %2217 = vmatprep.subr.bf16.mxu0 0
        %2218 = vmatpush1.bf16.msra.mxu0 %v2208
        %2219 = vmatprep.subr.bf16.mxu0 0
        %2220 = vmatpush1.bf16.msra.mxu0 %v2209
        %2221 = vmatprep.subr.bf16.mxu0 0
        %2222 = vmatpush1.bf16.msra.mxu0 0
        %2223 = vmatprep.subr.bf16.mxu0 0
        %2224 = vmatpush1.bf16.msra.mxu0 0
        %2225 = vmatprep.subr.bf16.mxu0 0
        %2226 = vmatpush1.bf16.msra.mxu0 0
        %2227 = vmatprep.subr.bf16.mxu0 0
        %2228 = vmatpush1.bf16.msra.mxu0 0
        %2229 = vmatprep.subr.bf16.mxu0 0
        %2230 = vmatpush1.bf16.msra.mxu0 0
        %2231 = vmatprep.subr.bf16.mxu0 0
        %2232 = vmatpush1.bf16.msra.mxu0 0
        %2233 = vmatprep.subr.bf16.mxu0 0
        %2234 = vmatpush1.bf16.msra.mxu0 0
        %2235 = vmatprep.subr.bf16.mxu0 0
        %2236 = vmatpush1.bf16.msra.mxu0 0
        %2237 = vmatprep.subr.bf16.mxu0 0
        %2238 = vmatpush1.bf16.msra.mxu0 0
        %2239 = vmatprep.subr.bf16.mxu0 0
        %2240 = vmatpush1.bf16.msra.mxu0 0
        %2241 = vmatprep.subr.bf16.mxu0 0
        %2242 = vmatpush1.bf16.msra.mxu0 0
        %2243 = vmatprep.subr.bf16.mxu0 0
        %2244 = vmatpush1.bf16.msra.mxu0 0
        %2245 = vmatprep.mubr.bf16.mxu0 0
        %2246 = vmatmul.mubr.bf16.gmra.mrb[0].mxu0 %v2211
        %v2247 = vpop.f32.mrb[0].mxu0
        %v2248 = vadd.f32 0.0, %v2247
        %v2249 = vpop.f32.mrb[0].mxu0
        %v2250 = vpop.f32.mrb[0].mxu0
        %v2251 = vpop.f32.mrb[0].mxu0
        %2252 = vdwg.mxu0
        %2253 = vst [vmem:[%s9] sm:$0xff] %v2248
      $region72: #{bitwise_tasnet_forward.1} parent=55 // pred_fallthru
        _
      // Predicated region
      $region73: #{bitwise_tasnet_forward.1} parent=55 // pred_check
        %p2254 = pneg %p267
      $region74: #{bitwise_tasnet_forward.1} parent=55 // pred_check_branch
        %2256 = sbr.rel (%p2254) target = $region76
      $region75: #{bitwise_tasnet_forward.1} parent=55 // pred_region
        _
      $region76: #{bitwise_tasnet_forward.1} parent=55 // pred_fallthru
        _
      // Predicated region
      $region77: #{bitwise_tasnet_forward.1} parent=55 // pred_check
        %p2257 = pneg %p267
      $region78: #{bitwise_tasnet_forward.1} parent=55 // pred_check_branch
        %2259 = sbr.rel (%p2257) target = $region80
      $region79: #{bitwise_tasnet_forward.1} parent=55 // pred_region
        _
      $region80: #{bitwise_tasnet_forward.1} parent=55 // pred_fallthru
        _
    $region56: #{bitwise_tasnet_forward.1} parent=5 // pred_fallthru
      _
    %p2260 = scmp.le.s32.totalorder 2, %s15
    // Predicated region
    $region81: #{bitwise_tasnet_forward.1} parent=5 // pred_check
      %p2261 = pneg %p2260
    $region82: #{bitwise_tasnet_forward.1} parent=5 // pred_check_branch
      %2263 = sbr.rel (%p2261) target = $region84
    $region83: #{bitwise_tasnet_forward.1} parent=5 // pred_region
      %s2264 = ssub.s32 %s15, 2
    $region84: #{bitwise_tasnet_forward.1} parent=5 // pred_fallthru
      _
  $region6: #{bitwise_tasnet_forward.1} parent=0 // loop_footer
    %s19 = sadd.s32 1, %s15
  $region7: #{bitwise_tasnet_forward.1} parent=0 // loop_footer_branch
    %14 = sbr.rel target = $region3
  $region8: #{bitwise_tasnet_forward.1} parent=0 // loop_exit
    _

</llo_original>
